<compile_context>
chip_gen: v6e
topology: v6e:2x2x1
jax: 0.10.0
libtpu: 0.0.40
codegen_flags: <defaults>
</compile_context>

<pallas_src>
import functools

import jax
import jax.numpy as jnp
from jax import lax
from jax.experimental import pallas as pl
from jax.experimental.pallas import tpu as pltpu


_TSUB = 8  # timesteps per in-kernel sub-tile (bounds live gi / vreg pressure)


def _round_up(n, m):
    return ((n + m - 1) // m) * m


def gru_kernel(x_ref, wih_ref, whh_ref, bgi_ref, bghn_ref, out_ref, h_ref,
               *, seq_len, ragged):
    """Grid = (batch_blocks, time_chunks); time is the inner 'arbitrary' axis.

    x_ref:    (Tc, Bb, Hp)  time-major embedded inputs for this chunk
    wih_ref:  (Hp, 3Hp)     padded W_ih^T, per-gate blocks lane-aligned (resident)
    whh_ref:  (Hp, 3Hp)     padded W_hh^T (resident)
    bgi_ref:  (1, 3Hp) f32  b_ih (all gates) + b_hh (r,z) folded together
    bghn_ref: (1, Hp)  f32  b_hh for the n gate (sits inside r * (...))
    out_ref:  (Bb, Hp)      final hidden state for this batch block
    h_ref:    (Bb, Hp) f32  hidden state carried across time chunks
    """
    ci = pl.program_id(1)

    @pl.when(ci == 0)
    def _():
        h_ref[...] = jnp.zeros_like(h_ref)

    Tc, Bb, Hp = x_ref.shape
    n_sub = Tc // _TSUB

    wih = wih_ref[...]
    whh = whh_ref[...]
    bgi = bgi_ref[...]          # (1, 3Hp) f32
    bghn = bghn_ref[...]        # (1, Hp)  f32
    t_base = ci * Tc

    def sub_tile(s, h):
        # Hoisted input projection for a small sub-tile of timesteps: one MXU
        # matmul; rows are time-major so per-t slices are static & aligned.
        start = pl.multiple_of(s * _TSUB, _TSUB)
        x_sub = x_ref[pl.ds(start, _TSUB), :, :]                      # (Tsub, Bb, Hp)
        gi = jnp.dot(x_sub.reshape(_TSUB * Bb, Hp), wih,
                     preferred_element_type=jnp.float32) + bgi        # (Tsub*Bb, 3Hp) f32

        # Serial recurrence over the sub-tile (static 8-step unroll).
        for t in range(_TSUB):
            gi_t = gi[t * Bb:(t + 1) * Bb, :]                         # static, tile-aligned
            gh = jnp.dot(h.astype(whh.dtype), whh,
                         preferred_element_type=jnp.float32)          # (Bb, 3Hp) f32
            # PyTorch GRU gate order (r, z, n); slices on 128-lane boundaries.
            r = jax.nn.sigmoid(gi_t[:, :Hp] + gh[:, :Hp])
            z = jax.nn.sigmoid(gi_t[:, Hp:2 * Hp] + gh[:, Hp:2 * Hp])
            n = jnp.tanh(gi_t[:, 2 * Hp:] + r * (gh[:, 2 * Hp:] + bghn))
            h_new = (1.0 - z) * n + z * h
            if ragged:
                # Only last chunk can contain padded timesteps; cheap select.
                h_new = jnp.where(t_base + start + t < seq_len, h_new, h)
            h = h_new
        return h

    h = lax.fori_loop(0, n_sub, sub_tile, h_ref[...])
    h_ref[...] = h

    @pl.when(ci == pl.num_programs(1) - 1)
    def _():
        out_ref[...] = h.astype(out_ref.dtype)


def _prep_gru_params(w_ih, w_hh, b_ih, b_hh, H, Hp, matmul_dtype):
    """Pad PyTorch-layout GRU params to lane-aligned per-gate blocks."""
    w_ih = w_ih.astype(jnp.float32)
    w_hh = w_hh.astype(jnp.float32)
    b_ih = b_ih.astype(jnp.float32)
    b_hh = b_hh.astype(jnp.float32)
    wih_t = jnp.zeros((Hp, 3 * Hp), jnp.float32)
    whh_t = jnp.zeros((Hp, 3 * Hp), jnp.float32)
    bgi = jnp.zeros((3 * Hp,), jnp.float32)
    bghn = jnp.zeros((Hp,), jnp.float32)
    for g in range(3):
        wih_t = wih_t.at[:H, g * Hp:g * Hp + H].set(w_ih[g * H:(g + 1) * H, :].T)
        whh_t = whh_t.at[:H, g * Hp:g * Hp + H].set(w_hh[g * H:(g + 1) * H, :].T)
    # Fold b_hh for the r and z gates into the hoisted projection bias.
    bgi = bgi.at[0 * Hp:0 * Hp + H].set(b_ih[0:H] + b_hh[0:H])
    bgi = bgi.at[1 * Hp:1 * Hp + H].set(b_ih[H:2 * H] + b_hh[H:2 * H])
    bgi = bgi.at[2 * Hp:2 * Hp + H].set(b_ih[2 * H:3 * H])
    # Keep b_hh_n separate: it sits inside r * (W_hn h + b_hn).
    bghn = bghn.at[:H].set(b_hh[2 * H:3 * H])
    return (wih_t.astype(matmul_dtype), whh_t.astype(matmul_dtype),
            bgi.reshape(1, 3 * Hp), bghn.reshape(1, Hp))


def _pick_time_chunk(T, Bb, Hp, itemsize, *, target_chunks=4,
                     x_vmem_budget=8 << 20):
    """Tc (multiple of _TSUB): bounded by an x-block VMEM budget, aiming for
    >= target_chunks chunks so the next x DMA overlaps the recurrence."""
    max_tc = max(_TSUB,
                 (x_vmem_budget // (2 * Bb * Hp * itemsize)) // _TSUB * _TSUB)
    t8 = _round_up(T, _TSUB)
    tc_overlap = max(_TSUB, _round_up(-(-t8 // target_chunks), _TSUB))
    return int(min(max_tc, tc_overlap))


def question_module_forward(questions, embedding, w_ih, w_hh, b_ih, b_hh,
                            *, time_chunk=None, matmul_dtype=jnp.bfloat16):
    """questions: (B, T) int32; embedding: (V, H); GRU weights in PyTorch layout
    (w_ih, w_hh: (3H, H); b_ih, b_hh: (3H,)). Returns (B, 1, H) float32."""
    B, T = questions.shape
    V, H = embedding.shape
    assert T >= 1, "empty sequence not supported"

    Hp = _round_up(H, 128)           # lane-align hidden (zero padding is exact)
    if B > 8:
        Bp = _round_up(B, 16)
        Bb = Bp // 2                 # 2 batch blocks -> 'parallel' axis (v7x dual-TC)
    else:
        Bp = 8
        Bb = 8

    itemsize = jnp.dtype(matmul_dtype).itemsize
    if time_chunk is None:
        Tc = _pick_time_chunk(T, Bb, Hp, itemsize)
    else:
        Tc = max(_TSUB, _round_up(int(time_chunk), _TSUB))
    T_pad = _round_up(T, Tc)
    ragged = T_pad != T

    # Wrapper glue: gather straight from the unpadded table, cast to the
    # matmul dtype, go time-major, then pad (time, batch, hidden) once.
    x = jnp.take(embedding, questions, axis=0).astype(matmul_dtype)   # (B, T, H)
    x = jnp.transpose(x, (1, 0, 2))                                   # (T, B, H)
    x = jnp.pad(x, ((0, T_pad - T), (0, Bp - B), (0, Hp - H)))        # (T_pad, Bp, Hp)

    wih_p, whh_p, bgi, bghn = _prep_gru_params(w_ih, w_hh, b_ih, b_hh,
                                               H, Hp, matmul_dtype)

    # Explicit VMEM budget: double-buffered x chunk + single-buffered weights.
    vmem_bytes = (2 * Tc * Bb * Hp * itemsize        # x chunk (2 pipeline buffers)
                  + 2 * Hp * 3 * Hp * itemsize       # W_ih^T + W_hh^T (1 buffer each)
                  + 4 * 4 * Hp                       # biases
                  + 3 * Bb * Hp * 4                  # out (2 bufs) + h scratch
                  + (4 << 20))                       # headroom / internal scratch
    vmem_bytes = int(min(max(vmem_bytes, 16 << 20), 64 << 20))

    kernel = functools.partial(gru_kernel, seq_len=T, ragged=ragged)
    resident = dict(pipeline_mode=pl.Buffered(1))    # constant-index, never re-fetched

    out = pl.pallas_call(
        kernel,
        out_shape=jax.ShapeDtypeStruct((Bp, Hp), jnp.float32),
        grid_spec=pltpu.PrefetchScalarGridSpec(
            num_scalar_prefetch=0,
            grid=(Bp // Bb, T_pad // Tc),
            in_specs=[
                pl.BlockSpec((Tc, Bb, Hp), lambda bi, ci: (ci, bi, 0)),      # x chunk
                pl.BlockSpec((Hp, 3 * Hp), lambda bi, ci: (0, 0), **resident),  # W_ih^T
                pl.BlockSpec((Hp, 3 * Hp), lambda bi, ci: (0, 0), **resident),  # W_hh^T
                pl.BlockSpec((1, 3 * Hp), lambda bi, ci: (0, 0), **resident),   # folded bias
                pl.BlockSpec((1, Hp), lambda bi, ci: (0, 0), **resident),       # b_hh_n
            ],
            out_specs=pl.BlockSpec((Bb, Hp), lambda bi, ci: (bi, 0)),
            scratch_shapes=[pltpu.VMEM((Bb, Hp), jnp.float32)],
        ),
        compiler_params=pltpu.CompilerParams(
            dimension_semantics=("parallel", "arbitrary"),
            vmem_limit_bytes=vmem_bytes),
    )(x, wih_p, whh_p, bgi, bghn)

    return out[:B, :H].reshape(B, 1, H)


# TODO(synk): on v5e one could hold W_hh resident in the MXU via
# pltpu.matmul_push_rhs / matmul_acc_lhs (3*Hp needs multiple 128-wide tiles);
# left on the standard jnp.dot path for portability.


if __name__ == "__main__":
    # Small, deterministic shapes consistent with the module.
    vocab_size = 50
    hidden_size = 32
    batch = 2
    seq_len = 8

    key = jax.random.PRNGKey(0)
    k_emb, k_wih, k_whh, k_bih, k_bhh, k_q, k_q2 = jax.random.split(key, 7)

    bound = 1.0 / jnp.sqrt(jnp.float32(hidden_size))
    embedding = jax.random.normal(k_emb, (vocab_size, hidden_size), jnp.float32) * 0.1
    w_ih = jax.random.uniform(k_wih, (3 * hidden_size, hidden_size), jnp.float32,
                              -bound, bound)
    w_hh = jax.random.uniform(k_whh, (3 * hidden_size, hidden_size), jnp.float32,
                              -bound, bound)
    b_ih = jax.random.uniform(k_bih, (3 * hidden_size,), jnp.float32, -bound, bound)
    b_hh = jax.random.uniform(k_bhh, (3 * hidden_size,), jnp.float32, -bound, bound)

    questions = jax.random.randint(k_q, (batch, seq_len), 0, vocab_size, jnp.int32)

    # Pure-JAX reference GRU (PyTorch semantics).
    def ref_forward(q):
        Br, Tr = q.shape
        x = jnp.take(embedding, q, axis=0)            # (B, T, H)
        h = jnp.zeros((Br, hidden_size), jnp.float32)
        Hh = hidden_size
        for t in range(Tr):
            xt = x[:, t, :]
            gi = xt @ w_ih.T + b_ih
            gh = h @ w_hh.T + b_hh
            r = jax.nn.sigmoid(gi[:, :Hh] + gh[:, :Hh])
            z = jax.nn.sigmoid(gi[:, Hh:2 * Hh] + gh[:, Hh:2 * Hh])
            n = jnp.tanh(gi[:, 2 * Hh:] + r * gh[:, 2 * Hh:])
            h = (1.0 - z) * n + z * h
        return h[:, None, :]

    ref = ref_forward(questions)

    # Default (bf16 matmul operands, f32 accumulation / gates).
    out_bf16 = question_module_forward(questions, embedding, w_ih, w_hh, b_ih, b_hh)
    out_bf16 = jax.block_until_ready(out_bf16)
    assert out_bf16.shape == (batch, 1, hidden_size), out_bf16.shape
    assert jnp.allclose(out_bf16, ref, atol=5e-2), (
        float(jnp.max(jnp.abs(out_bf16 - ref))))

    # Full f32 path — tight tolerance.
    out_f32 = question_module_forward(questions, embedding, w_ih, w_hh, b_ih, b_hh,
                                      matmul_dtype=jnp.float32)
    out_f32 = jax.block_until_ready(out_f32)
    assert jnp.allclose(out_f32, ref, atol=1e-5, rtol=1e-5), (
        float(jnp.max(jnp.abs(out_f32 - ref))))

    # Exercise ragged T, multiple time chunks and two batch blocks.
    batch2, seq2 = 10, 20
    questions2 = jax.random.randint(k_q2, (batch2, seq2), 0, vocab_size, jnp.int32)
    out2 = question_module_forward(questions2, embedding, w_ih, w_hh, b_ih, b_hh,
                                   time_chunk=8, matmul_dtype=jnp.float32)
    out2 = jax.block_until_ready(out2)
    ref2 = ref_forward(questions2)
    assert out2.shape == (batch2, 1, hidden_size), out2.shape
    assert jnp.allclose(out2, ref2, atol=1e-4, rtol=1e-4), (
        float(jnp.max(jnp.abs(out2 - ref2))))

    print("KERNEL_OK")
</pallas_src>

<mosaic_0001>
module attributes {stable_mosaic.version = 11 : i64} {
  func.func @gru_kernel(%arg0: i32, %arg1: i32, %arg2: memref<8x8x128xbf16, #tpu.memory_space<vmem>>, %arg3: memref<128x384xbf16, #tpu.memory_space<vmem>>, %arg4: memref<128x384xbf16, #tpu.memory_space<vmem>>, %arg5: memref<1x384xf32, #tpu.memory_space<vmem>>, %arg6: memref<1x128xf32, #tpu.memory_space<vmem>>, %arg7: memref<8x128xf32, #tpu.memory_space<vmem>>, %arg8: memref<8x128xf32, #tpu.memory_space<vmem>>) attributes {dimension_semantics = [#tpu.dimension_semantics<parallel>, #tpu.dimension_semantics<arbitrary>], iteration_bounds = array<i64: 1, 1>, scalar_prefetch = 0 : i64, scratch_operands = 1 : i64, tpu.core_type = #tpu.core_type<tc>, window_params = [{transform_indices = @transform_0, window_bounds = array<i64: 8, 8, 128>}, {pipeline_mode = #tpu.pipeline_mode<synchronous>, transform_indices = @transform_1, window_bounds = array<i64: 128, 384>}, {pipeline_mode = #tpu.pipeline_mode<synchronous>, transform_indices = @transform_2, window_bounds = array<i64: 128, 384>}, {pipeline_mode = #tpu.pipeline_mode<synchronous>, transform_indices = @transform_3, window_bounds = array<i64: 1, 384>}, {pipeline_mode = #tpu.pipeline_mode<synchronous>, transform_indices = @transform_4, window_bounds = array<i64: 1, 128>}, {transform_indices = @transform_5, window_bounds = array<i64: 8, 128>}]} {
    %c0_i32 = arith.constant 0 : i32
    %0 = arith.cmpi eq, %arg1, %c0_i32 : i32
    %1 = arith.extui %0 : i1 to i32
    %c0_i32_0 = arith.constant 0 : i32
    %2 = arith.cmpi ne, %1, %c0_i32_0 : i32
    scf.if %2 {
      %cst_49 = arith.constant 0.000000e+00 : f32
      %268 = vector.broadcast %cst_49 : f32 to vector<8x128xf32>
      %c0_50 = arith.constant 0 : index
      %c0_51 = arith.constant 0 : index
      %269 = vector.load %arg8[%c0_50, %c0_51] : memref<8x128xf32, #tpu.memory_space<vmem>>, vector<8x128xf32>
      tpu.vector_store %arg8[%c0_50, %c0_51], %268 {strides = array<i32>} : memref<8x128xf32, #tpu.memory_space<vmem>>, vector<8x128xf32>,
    } else {
    }
    %c0 = arith.constant 0 : index
    %c0_1 = arith.constant 0 : index
    %3 = vector.load %arg3[%c0, %c0_1] : memref<128x384xbf16, #tpu.memory_space<vmem>>, vector<128x384xbf16>
    %c0_2 = arith.constant 0 : index
    %c0_3 = arith.constant 0 : index
    %4 = vector.load %arg4[%c0_2, %c0_3] : memref<128x384xbf16, #tpu.memory_space<vmem>>, vector<128x384xbf16>
    %c0_4 = arith.constant 0 : index
    %c0_5 = arith.constant 0 : index
    %5 = vector.load %arg5[%c0_4, %c0_5] : memref<1x384xf32, #tpu.memory_space<vmem>>, vector<1x384xf32>
    %c0_6 = arith.constant 0 : index
    %c0_7 = arith.constant 0 : index
    %6 = vector.load %arg6[%c0_6, %c0_7] : memref<1x128xf32, #tpu.memory_space<vmem>>, vector<1x128xf32>
    %c0_8 = arith.constant 0 : index
    %c0_9 = arith.constant 0 : index
    %7 = vector.load %arg8[%c0_8, %c0_9] : memref<8x128xf32, #tpu.memory_space<vmem>>, vector<8x128xf32>
    %c0_i32_10 = arith.constant 0 : i32
    %c8_i32 = arith.constant 8 : i32
    %8 = arith.muli %c0_i32_10, %c8_i32 : i32
    %9 = tpu.assume_multiple %8, 8 : i32
    %10 = arith.index_cast %9 : i32 to index
    %c0_11 = arith.constant 0 : index
    %c0_12 = arith.constant 0 : index
    %11 = vector.load %arg2[%10, %c0_11, %c0_12] : memref<8x8x128xbf16, #tpu.memory_space<vmem>>, vector<8x8x128xbf16>
    %12 = vector.shape_cast %11 : vector<8x8x128xbf16> to vector<64x128xbf16>
    %cst = arith.constant dense<0.000000e+00> : vector<64x384xf32>
    %13 = tpu.matmul %12, %3, %cst {dimension_numbers = #tpu.dot_dimension_numbers<[1], [0], [0], [1], [0, 0, 1, 1], [], []>} : vector<64x128xbf16>, vector<128x384xbf16>, vector<64x384xf32> -> vector<64x384xf32>
    %14 = vector.broadcast %5 : vector<1x384xf32> to vector<64x384xf32>
    %15 = arith.addf %13, %14 : vector<64x384xf32>
    %16 = vector.extract_strided_slice %15 {offsets = [0, 0], sizes = [8, 384], strides = [1, 1]} : vector<64x384xf32> to vector<8x384xf32>
    %17 = arith.truncf %7 : vector<8x128xf32> to vector<8x128xbf16>
    %cst_13 = arith.constant dense<0.000000e+00> : vector<8x384xf32>
    %18 = tpu.matmul %17, %4, %cst_13 {dimension_numbers = #tpu.dot_dimension_numbers<[1], [0], [0], [1], [0, 0, 1, 1], [], []>} : vector<8x128xbf16>, vector<128x384xbf16>, vector<8x384xf32> -> vector<8x384xf32>
    %19 = vector.extract_strided_slice %16 {offsets = [0, 0], sizes = [8, 128], strides = [1, 1]} : vector<8x384xf32> to vector<8x128xf32>
    %20 = vector.extract_strided_slice %18 {offsets = [0, 0], sizes = [8, 128], strides = [1, 1]} : vector<8x384xf32> to vector<8x128xf32>
    %21 = arith.addf %19, %20 : vector<8x128xf32>
    %22 = arith.negf %21 : vector<8x128xf32>
    %23 = math.exp %22 : vector<8x128xf32>
    %cst_14 = arith.constant 1.000000e+00 : f32
    %24 = vector.broadcast %cst_14 : f32 to vector<8x128xf32>
    %25 = arith.addf %24, %23 : vector<8x128xf32>
    %26 = arith.divf %24, %25 : vector<8x128xf32>
    %27 = vector.extract_strided_slice %16 {offsets = [0, 128], sizes = [8, 128], strides = [1, 1]} : vector<8x384xf32> to vector<8x128xf32>
    %28 = vector.extract_strided_slice %18 {offsets = [0, 128], sizes = [8, 128], strides = [1, 1]} : vector<8x384xf32> to vector<8x128xf32>
    %29 = arith.addf %27, %28 : vector<8x128xf32>
    %30 = arith.negf %29 : vector<8x128xf32>
    %31 = math.exp %30 : vector<8x128xf32>
    %cst_15 = arith.constant 1.000000e+00 : f32
    %32 = vector.broadcast %cst_15 : f32 to vector<8x128xf32>
    %33 = arith.addf %32, %31 : vector<8x128xf32>
    %34 = arith.divf %32, %33 : vector<8x128xf32>
    %35 = vector.extract_strided_slice %16 {offsets = [0, 256], sizes = [8, 128], strides = [1, 1]} : vector<8x384xf32> to vector<8x128xf32>
    %36 = vector.extract_strided_slice %18 {offsets = [0, 256], sizes = [8, 128], strides = [1, 1]} : vector<8x384xf32> to vector<8x128xf32>
    %37 = vector.broadcast %6 : vector<1x128xf32> to vector<8x128xf32>
    %38 = arith.addf %36, %37 : vector<8x128xf32>
    %39 = arith.mulf %26, %38 : vector<8x128xf32>
    %40 = arith.addf %35, %39 : vector<8x128xf32>
    %41 = math.tanh %40 : vector<8x128xf32>
    %cst_16 = arith.constant 1.000000e+00 : f32
    %42 = vector.broadcast %cst_16 : f32 to vector<8x128xf32>
    %43 = arith.subf %42, %34 : vector<8x128xf32>
    %44 = arith.mulf %43, %41 : vector<8x128xf32>
    %45 = arith.mulf %34, %7 : vector<8x128xf32>
    %46 = arith.addf %44, %45 : vector<8x128xf32>
    %47 = vector.extract_strided_slice %15 {offsets = [8, 0], sizes = [8, 384], strides = [1, 1]} : vector<64x384xf32> to vector<8x384xf32>
    %48 = arith.truncf %46 : vector<8x128xf32> to vector<8x128xbf16>
    %cst_17 = arith.constant dense<0.000000e+00> : vector<8x384xf32>
    %49 = tpu.matmul %48, %4, %cst_17 {dimension_numbers = #tpu.dot_dimension_numbers<[1], [0], [0], [1], [0, 0, 1, 1], [], []>} : vector<8x128xbf16>, vector<128x384xbf16>, vector<8x384xf32> -> vector<8x384xf32>
    %50 = vector.extract_strided_slice %47 {offsets = [0, 0], sizes = [8, 128], strides = [1, 1]} : vector<8x384xf32> to vector<8x128xf32>
    %51 = vector.extract_strided_slice %49 {offsets = [0, 0], sizes = [8, 128], strides = [1, 1]} : vector<8x384xf32> to vector<8x128xf32>
    %52 = arith.addf %50, %51 : vector<8x128xf32>
    %53 = arith.negf %52 : vector<8x128xf32>
    %54 = math.exp %53 : vector<8x128xf32>
    %cst_18 = arith.constant 1.000000e+00 : f32
    %55 = vector.broadcast %cst_18 : f32 to vector<8x128xf32>
    %56 = arith.addf %55, %54 : vector<8x128xf32>
    %57 = arith.divf %55, %56 : vector<8x128xf32>
    %58 = vector.extract_strided_slice %47 {offsets = [0, 128], sizes = [8, 128], strides = [1, 1]} : vector<8x384xf32> to vector<8x128xf32>
    %59 = vector.extract_strided_slice %49 {offsets = [0, 128], sizes = [8, 128], strides = [1, 1]} : vector<8x384xf32> to vector<8x128xf32>
    %60 = arith.addf %58, %59 : vector<8x128xf32>
    %61 = arith.negf %60 : vector<8x128xf32>
    %62 = math.exp %61 : vector<8x128xf32>
    %cst_19 = arith.constant 1.000000e+00 : f32
    %63 = vector.broadcast %cst_19 : f32 to vector<8x128xf32>
    %64 = arith.addf %63, %62 : vector<8x128xf32>
    %65 = arith.divf %63, %64 : vector<8x128xf32>
    %66 = vector.extract_strided_slice %47 {offsets = [0, 256], sizes = [8, 128], strides = [1, 1]} : vector<8x384xf32> to vector<8x128xf32>
    %67 = vector.extract_strided_slice %49 {offsets = [0, 256], sizes = [8, 128], strides = [1, 1]} : vector<8x384xf32> to vector<8x128xf32>
    %68 = vector.broadcast %6 : vector<1x128xf32> to vector<8x128xf32>
    %69 = arith.addf %67, %68 : vector<8x128xf32>
    %70 = arith.mulf %57, %69 : vector<8x128xf32>
    %71 = arith.addf %66, %70 : vector<8x128xf32>
    %72 = math.tanh %71 : vector<8x128xf32>
    %cst_20 = arith.constant 1.000000e+00 : f32
    %73 = vector.broadcast %cst_20 : f32 to vector<8x128xf32>
    %74 = arith.subf %73, %65 : vector<8x128xf32>
    %75 = arith.mulf %74, %72 : vector<8x128xf32>
    %76 = arith.mulf %65, %46 : vector<8x128xf32>
    %77 = arith.addf %75, %76 : vector<8x128xf32>
    %78 = vector.extract_strided_slice %15 {offsets = [16, 0], sizes = [8, 384], strides = [1, 1]} : vector<64x384xf32> to vector<8x384xf32>
    %79 = arith.truncf %77 : vector<8x128xf32> to vector<8x128xbf16>
    %cst_21 = arith.constant dense<0.000000e+00> : vector<8x384xf32>
    %80 = tpu.matmul %79, %4, %cst_21 {dimension_numbers = #tpu.dot_dimension_numbers<[1], [0], [0], [1], [0, 0, 1, 1], [], []>} : vector<8x128xbf16>, vector<128x384xbf16>, vector<8x384xf32> -> vector<8x384xf32>
    %81 = vector.extract_strided_slice %78 {offsets = [0, 0], sizes = [8, 128], strides = [1, 1]} : vector<8x384xf32> to vector<8x128xf32>
    %82 = vector.extract_strided_slice %80 {offsets = [0, 0], sizes = [8, 128], strides = [1, 1]} : vector<8x384xf32> to vector<8x128xf32>
    %83 = arith.addf %81, %82 : vector<8x128xf32>
    %84 = arith.negf %83 : vector<8x128xf32>
    %85 = math.exp %84 : vector<8x128xf32>
    %cst_22 = arith.constant 1.000000e+00 : f32
    %86 = vector.broadcast %cst_22 : f32 to vector<8x128xf32>
    %87 = arith.addf %86, %85 : vector<8x128xf32>
    %88 = arith.divf %86, %87 : vector<8x128xf32>
    %89 = vector.extract_strided_slice %78 {offsets = [0, 128], sizes = [8, 128], strides = [1, 1]} : vector<8x384xf32> to vector<8x128xf32>
    %90 = vector.extract_strided_slice %80 {offsets = [0, 128], sizes = [8, 128], strides = [1, 1]} : vector<8x384xf32> to vector<8x128xf32>
    %91 = arith.addf %89, %90 : vector<8x128xf32>
    %92 = arith.negf %91 : vector<8x128xf32>
    %93 = math.exp %92 : vector<8x128xf32>
    %cst_23 = arith.constant 1.000000e+00 : f32
    %94 = vector.broadcast %cst_23 : f32 to vector<8x128xf32>
    %95 = arith.addf %94, %93 : vector<8x128xf32>
    %96 = arith.divf %94, %95 : vector<8x128xf32>
    %97 = vector.extract_strided_slice %78 {offsets = [0, 256], sizes = [8, 128], strides = [1, 1]} : vector<8x384xf32> to vector<8x128xf32>
    %98 = vector.extract_strided_slice %80 {offsets = [0, 256], sizes = [8, 128], strides = [1, 1]} : vector<8x384xf32> to vector<8x128xf32>
    %99 = vector.broadcast %6 : vector<1x128xf32> to vector<8x128xf32>
    %100 = arith.addf %98, %99 : vector<8x128xf32>
    %101 = arith.mulf %88, %100 : vector<8x128xf32>
    %102 = arith.addf %97, %101 : vector<8x128xf32>
    %103 = math.tanh %102 : vector<8x128xf32>
    %cst_24 = arith.constant 1.000000e+00 : f32
    %104 = vector.broadcast %cst_24 : f32 to vector<8x128xf32>
    %105 = arith.subf %104, %96 : vector<8x128xf32>
    %106 = arith.mulf %105, %103 : vector<8x128xf32>
    %107 = arith.mulf %96, %77 : vector<8x128xf32>
    %108 = arith.addf %106, %107 : vector<8x128xf32>
    %109 = vector.extract_strided_slice %15 {offsets = [24, 0], sizes = [8, 384], strides = [1, 1]} : vector<64x384xf32> to vector<8x384xf32>
    %110 = arith.truncf %108 : vector<8x128xf32> to vector<8x128xbf16>
    %cst_25 = arith.constant dense<0.000000e+00> : vector<8x384xf32>
    %111 = tpu.matmul %110, %4, %cst_25 {dimension_numbers = #tpu.dot_dimension_numbers<[1], [0], [0], [1], [0, 0, 1, 1], [], []>} : vector<8x128xbf16>, vector<128x384xbf16>, vector<8x384xf32> -> vector<8x384xf32>
    %112 = vector.extract_strided_slice %109 {offsets = [0, 0], sizes = [8, 128], strides = [1, 1]} : vector<8x384xf32> to vector<8x128xf32>
    %113 = vector.extract_strided_slice %111 {offsets = [0, 0], sizes = [8, 128], strides = [1, 1]} : vector<8x384xf32> to vector<8x128xf32>
    %114 = arith.addf %112, %113 : vector<8x128xf32>
    %115 = arith.negf %114 : vector<8x128xf32>
    %116 = math.exp %115 : vector<8x128xf32>
    %cst_26 = arith.constant 1.000000e+00 : f32
    %117 = vector.broadcast %cst_26 : f32 to vector<8x128xf32>
    %118 = arith.addf %117, %116 : vector<8x128xf32>
    %119 = arith.divf %117, %118 : vector<8x128xf32>
    %120 = vector.extract_strided_slice %109 {offsets = [0, 128], sizes = [8, 128], strides = [1, 1]} : vector<8x384xf32> to vector<8x128xf32>
    %121 = vector.extract_strided_slice %111 {offsets = [0, 128], sizes = [8, 128], strides = [1, 1]} : vector<8x384xf32> to vector<8x128xf32>
    %122 = arith.addf %120, %121 : vector<8x128xf32>
    %123 = arith.negf %122 : vector<8x128xf32>
    %124 = math.exp %123 : vector<8x128xf32>
    %cst_27 = arith.constant 1.000000e+00 : f32
    %125 = vector.broadcast %cst_27 : f32 to vector<8x128xf32>
    %126 = arith.addf %125, %124 : vector<8x128xf32>
    %127 = arith.divf %125, %126 : vector<8x128xf32>
    %128 = vector.extract_strided_slice %109 {offsets = [0, 256], sizes = [8, 128], strides = [1, 1]} : vector<8x384xf32> to vector<8x128xf32>
    %129 = vector.extract_strided_slice %111 {offsets = [0, 256], sizes = [8, 128], strides = [1, 1]} : vector<8x384xf32> to vector<8x128xf32>
    %130 = vector.broadcast %6 : vector<1x128xf32> to vector<8x128xf32>
    %131 = arith.addf %129, %130 : vector<8x128xf32>
    %132 = arith.mulf %119, %131 : vector<8x128xf32>
    %133 = arith.addf %128, %132 : vector<8x128xf32>
    %134 = math.tanh %133 : vector<8x128xf32>
    %cst_28 = arith.constant 1.000000e+00 : f32
    %135 = vector.broadcast %cst_28 : f32 to vector<8x128xf32>
    %136 = arith.subf %135, %127 : vector<8x128xf32>
    %137 = arith.mulf %136, %134 : vector<8x128xf32>
    %138 = arith.mulf %127, %108 : vector<8x128xf32>
    %139 = arith.addf %137, %138 : vector<8x128xf32>
    %140 = vector.extract_strided_slice %15 {offsets = [32, 0], sizes = [8, 384], strides = [1, 1]} : vector<64x384xf32> to vector<8x384xf32>
    %141 = arith.truncf %139 : vector<8x128xf32> to vector<8x128xbf16>
    %cst_29 = arith.constant dense<0.000000e+00> : vector<8x384xf32>
    %142 = tpu.matmul %141, %4, %cst_29 {dimension_numbers = #tpu.dot_dimension_numbers<[1], [0], [0], [1], [0, 0, 1, 1], [], []>} : vector<8x128xbf16>, vector<128x384xbf16>, vector<8x384xf32> -> vector<8x384xf32>
    %143 = vector.extract_strided_slice %140 {offsets = [0, 0], sizes = [8, 128], strides = [1, 1]} : vector<8x384xf32> to vector<8x128xf32>
    %144 = vector.extract_strided_slice %142 {offsets = [0, 0], sizes = [8, 128], strides = [1, 1]} : vector<8x384xf32> to vector<8x128xf32>
    %145 = arith.addf %143, %144 : vector<8x128xf32>
    %146 = arith.negf %145 : vector<8x128xf32>
    %147 = math.exp %146 : vector<8x128xf32>
    %cst_30 = arith.constant 1.000000e+00 : f32
    %148 = vector.broadcast %cst_30 : f32 to vector<8x128xf32>
    %149 = arith.addf %148, %147 : vector<8x128xf32>
    %150 = arith.divf %148, %149 : vector<8x128xf32>
    %151 = vector.extract_strided_slice %140 {offsets = [0, 128], sizes = [8, 128], strides = [1, 1]} : vector<8x384xf32> to vector<8x128xf32>
    %152 = vector.extract_strided_slice %142 {offsets = [0, 128], sizes = [8, 128], strides = [1, 1]} : vector<8x384xf32> to vector<8x128xf32>
    %153 = arith.addf %151, %152 : vector<8x128xf32>
    %154 = arith.negf %153 : vector<8x128xf32>
    %155 = math.exp %154 : vector<8x128xf32>
    %cst_31 = arith.constant 1.000000e+00 : f32
    %156 = vector.broadcast %cst_31 : f32 to vector<8x128xf32>
    %157 = arith.addf %156, %155 : vector<8x128xf32>
    %158 = arith.divf %156, %157 : vector<8x128xf32>
    %159 = vector.extract_strided_slice %140 {offsets = [0, 256], sizes = [8, 128], strides = [1, 1]} : vector<8x384xf32> to vector<8x128xf32>
    %160 = vector.extract_strided_slice %142 {offsets = [0, 256], sizes = [8, 128], strides = [1, 1]} : vector<8x384xf32> to vector<8x128xf32>
    %161 = vector.broadcast %6 : vector<1x128xf32> to vector<8x128xf32>
    %162 = arith.addf %160, %161 : vector<8x128xf32>
    %163 = arith.mulf %150, %162 : vector<8x128xf32>
    %164 = arith.addf %159, %163 : vector<8x128xf32>
    %165 = math.tanh %164 : vector<8x128xf32>
    %cst_32 = arith.constant 1.000000e+00 : f32
    %166 = vector.broadcast %cst_32 : f32 to vector<8x128xf32>
    %167 = arith.subf %166, %158 : vector<8x128xf32>
    %168 = arith.mulf %167, %165 : vector<8x128xf32>
    %169 = arith.mulf %158, %139 : vector<8x128xf32>
    %170 = arith.addf %168, %169 : vector<8x128xf32>
    %171 = vector.extract_strided_slice %15 {offsets = [40, 0], sizes = [8, 384], strides = [1, 1]} : vector<64x384xf32> to vector<8x384xf32>
    %172 = arith.truncf %170 : vector<8x128xf32> to vector<8x128xbf16>
    %cst_33 = arith.constant dense<0.000000e+00> : vector<8x384xf32>
    %173 = tpu.matmul %172, %4, %cst_33 {dimension_numbers = #tpu.dot_dimension_numbers<[1], [0], [0], [1], [0, 0, 1, 1], [], []>} : vector<8x128xbf16>, vector<128x384xbf16>, vector<8x384xf32> -> vector<8x384xf32>
    %174 = vector.extract_strided_slice %171 {offsets = [0, 0], sizes = [8, 128], strides = [1, 1]} : vector<8x384xf32> to vector<8x128xf32>
    %175 = vector.extract_strided_slice %173 {offsets = [0, 0], sizes = [8, 128], strides = [1, 1]} : vector<8x384xf32> to vector<8x128xf32>
    %176 = arith.addf %174, %175 : vector<8x128xf32>
    %177 = arith.negf %176 : vector<8x128xf32>
    %178 = math.exp %177 : vector<8x128xf32>
    %cst_34 = arith.constant 1.000000e+00 : f32
    %179 = vector.broadcast %cst_34 : f32 to vector<8x128xf32>
    %180 = arith.addf %179, %178 : vector<8x128xf32>
    %181 = arith.divf %179, %180 : vector<8x128xf32>
    %182 = vector.extract_strided_slice %171 {offsets = [0, 128], sizes = [8, 128], strides = [1, 1]} : vector<8x384xf32> to vector<8x128xf32>
    %183 = vector.extract_strided_slice %173 {offsets = [0, 128], sizes = [8, 128], strides = [1, 1]} : vector<8x384xf32> to vector<8x128xf32>
    %184 = arith.addf %182, %183 : vector<8x128xf32>
    %185 = arith.negf %184 : vector<8x128xf32>
    %186 = math.exp %185 : vector<8x128xf32>
    %cst_35 = arith.constant 1.000000e+00 : f32
    %187 = vector.broadcast %cst_35 : f32 to vector<8x128xf32>
    %188 = arith.addf %187, %186 : vector<8x128xf32>
    %189 = arith.divf %187, %188 : vector<8x128xf32>
    %190 = vector.extract_strided_slice %171 {offsets = [0, 256], sizes = [8, 128], strides = [1, 1]} : vector<8x384xf32> to vector<8x128xf32>
    %191 = vector.extract_strided_slice %173 {offsets = [0, 256], sizes = [8, 128], strides = [1, 1]} : vector<8x384xf32> to vector<8x128xf32>
    %192 = vector.broadcast %6 : vector<1x128xf32> to vector<8x128xf32>
    %193 = arith.addf %191, %192 : vector<8x128xf32>
    %194 = arith.mulf %181, %193 : vector<8x128xf32>
    %195 = arith.addf %190, %194 : vector<8x128xf32>
    %196 = math.tanh %195 : vector<8x128xf32>
    %cst_36 = arith.constant 1.000000e+00 : f32
    %197 = vector.broadcast %cst_36 : f32 to vector<8x128xf32>
    %198 = arith.subf %197, %189 : vector<8x128xf32>
    %199 = arith.mulf %198, %196 : vector<8x128xf32>
    %200 = arith.mulf %189, %170 : vector<8x128xf32>
    %201 = arith.addf %199, %200 : vector<8x128xf32>
    %202 = vector.extract_strided_slice %15 {offsets = [48, 0], sizes = [8, 384], strides = [1, 1]} : vector<64x384xf32> to vector<8x384xf32>
    %203 = arith.truncf %201 : vector<8x128xf32> to vector<8x128xbf16>
    %cst_37 = arith.constant dense<0.000000e+00> : vector<8x384xf32>
    %204 = tpu.matmul %203, %4, %cst_37 {dimension_numbers = #tpu.dot_dimension_numbers<[1], [0], [0], [1], [0, 0, 1, 1], [], []>} : vector<8x128xbf16>, vector<128x384xbf16>, vector<8x384xf32> -> vector<8x384xf32>
    %205 = vector.extract_strided_slice %202 {offsets = [0, 0], sizes = [8, 128], strides = [1, 1]} : vector<8x384xf32> to vector<8x128xf32>
    %206 = vector.extract_strided_slice %204 {offsets = [0, 0], sizes = [8, 128], strides = [1, 1]} : vector<8x384xf32> to vector<8x128xf32>
    %207 = arith.addf %205, %206 : vector<8x128xf32>
    %208 = arith.negf %207 : vector<8x128xf32>
    %209 = math.exp %208 : vector<8x128xf32>
    %cst_38 = arith.constant 1.000000e+00 : f32
    %210 = vector.broadcast %cst_38 : f32 to vector<8x128xf32>
    %211 = arith.addf %210, %209 : vector<8x128xf32>
    %212 = arith.divf %210, %211 : vector<8x128xf32>
    %213 = vector.extract_strided_slice %202 {offsets = [0, 128], sizes = [8, 128], strides = [1, 1]} : vector<8x384xf32> to vector<8x128xf32>
    %214 = vector.extract_strided_slice %204 {offsets = [0, 128], sizes = [8, 128], strides = [1, 1]} : vector<8x384xf32> to vector<8x128xf32>
    %215 = arith.addf %213, %214 : vector<8x128xf32>
    %216 = arith.negf %215 : vector<8x128xf32>
    %217 = math.exp %216 : vector<8x128xf32>
    %cst_39 = arith.constant 1.000000e+00 : f32
    %218 = vector.broadcast %cst_39 : f32 to vector<8x128xf32>
    %219 = arith.addf %218, %217 : vector<8x128xf32>
    %220 = arith.divf %218, %219 : vector<8x128xf32>
    %221 = vector.extract_strided_slice %202 {offsets = [0, 256], sizes = [8, 128], strides = [1, 1]} : vector<8x384xf32> to vector<8x128xf32>
    %222 = vector.extract_strided_slice %204 {offsets = [0, 256], sizes = [8, 128], strides = [1, 1]} : vector<8x384xf32> to vector<8x128xf32>
    %223 = vector.broadcast %6 : vector<1x128xf32> to vector<8x128xf32>
    %224 = arith.addf %222, %223 : vector<8x128xf32>
    %225 = arith.mulf %212, %224 : vector<8x128xf32>
    %226 = arith.addf %221, %225 : vector<8x128xf32>
    %227 = math.tanh %226 : vector<8x128xf32>
    %cst_40 = arith.constant 1.000000e+00 : f32
    %228 = vector.broadcast %cst_40 : f32 to vector<8x128xf32>
    %229 = arith.subf %228, %220 : vector<8x128xf32>
    %230 = arith.mulf %229, %227 : vector<8x128xf32>
    %231 = arith.mulf %220, %201 : vector<8x128xf32>
    %232 = arith.addf %230, %231 : vector<8x128xf32>
    %233 = vector.extract_strided_slice %15 {offsets = [56, 0], sizes = [8, 384], strides = [1, 1]} : vector<64x384xf32> to vector<8x384xf32>
    %234 = arith.truncf %232 : vector<8x128xf32> to vector<8x128xbf16>
    %cst_41 = arith.constant dense<0.000000e+00> : vector<8x384xf32>
    %235 = tpu.matmul %234, %4, %cst_41 {dimension_numbers = #tpu.dot_dimension_numbers<[1], [0], [0], [1], [0, 0, 1, 1], [], []>} : vector<8x128xbf16>, vector<128x384xbf16>, vector<8x384xf32> -> vector<8x384xf32>
    %236 = vector.extract_strided_slice %233 {offsets = [0, 0], sizes = [8, 128], strides = [1, 1]} : vector<8x384xf32> to vector<8x128xf32>
    %237 = vector.extract_strided_slice %235 {offsets = [0, 0], sizes = [8, 128], strides = [1, 1]} : vector<8x384xf32> to vector<8x128xf32>
    %238 = arith.addf %236, %237 : vector<8x128xf32>
    %239 = arith.negf %238 : vector<8x128xf32>
    %240 = math.exp %239 : vector<8x128xf32>
    %cst_42 = arith.constant 1.000000e+00 : f32
    %241 = vector.broadcast %cst_42 : f32 to vector<8x128xf32>
    %242 = arith.addf %241, %240 : vector<8x128xf32>
    %243 = arith.divf %241, %242 : vector<8x128xf32>
    %244 = vector.extract_strided_slice %233 {offsets = [0, 128], sizes = [8, 128], strides = [1, 1]} : vector<8x384xf32> to vector<8x128xf32>
    %245 = vector.extract_strided_slice %235 {offsets = [0, 128], sizes = [8, 128], strides = [1, 1]} : vector<8x384xf32> to vector<8x128xf32>
    %246 = arith.addf %244, %245 : vector<8x128xf32>
    %247 = arith.negf %246 : vector<8x128xf32>
    %248 = math.exp %247 : vector<8x128xf32>
    %cst_43 = arith.constant 1.000000e+00 : f32
    %249 = vector.broadcast %cst_43 : f32 to vector<8x128xf32>
    %250 = arith.addf %249, %248 : vector<8x128xf32>
    %251 = arith.divf %249, %250 : vector<8x128xf32>
    %252 = vector.extract_strided_slice %233 {offsets = [0, 256], sizes = [8, 128], strides = [1, 1]} : vector<8x384xf32> to vector<8x128xf32>
    %253 = vector.extract_strided_slice %235 {offsets = [0, 256], sizes = [8, 128], strides = [1, 1]} : vector<8x384xf32> to vector<8x128xf32>
    %254 = vector.broadcast %6 : vector<1x128xf32> to vector<8x128xf32>
    %255 = arith.addf %253, %254 : vector<8x128xf32>
    %256 = arith.mulf %243, %255 : vector<8x128xf32>
    %257 = arith.addf %252, %256 : vector<8x128xf32>
    %258 = math.tanh %257 : vector<8x128xf32>
    %cst_44 = arith.constant 1.000000e+00 : f32
    %259 = vector.broadcast %cst_44 : f32 to vector<8x128xf32>
    %260 = arith.subf %259, %251 : vector<8x128xf32>
    %261 = arith.mulf %260, %258 : vector<8x128xf32>
    %262 = arith.mulf %251, %232 : vector<8x128xf32>
    %263 = arith.addf %261, %262 : vector<8x128xf32>
    %c1_i32 = arith.constant 1 : i32
    %c0_45 = arith.constant 0 : index
    %c0_46 = arith.constant 0 : index
    %264 = vector.load %arg8[%c0_45, %c0_46] : memref<8x128xf32, #tpu.memory_space<vmem>>, vector<8x128xf32>
    tpu.vector_store %arg8[%c0_45, %c0_46], %263 {strides = array<i32>} : memref<8x128xf32, #tpu.memory_space<vmem>>, vector<8x128xf32>,
    %c0_i32_47 = arith.constant 0 : i32
    %265 = arith.cmpi eq, %arg1, %c0_i32_47 : i32
    %266 = arith.extui %265 : i1 to i32
    %c0_i32_48 = arith.constant 0 : i32
    %267 = arith.cmpi ne, %266, %c0_i32_48 : i32
    scf.if %267 {
      %c0_49 = arith.constant 0 : index
      %c0_50 = arith.constant 0 : index
      %268 = vector.load %arg7[%c0_49, %c0_50] : memref<8x128xf32, #tpu.memory_space<vmem>>, vector<8x128xf32>
      tpu.vector_store %arg7[%c0_49, %c0_50], %263 {strides = array<i32>} : memref<8x128xf32, #tpu.memory_space<vmem>>, vector<8x128xf32>,
    } else {
    }
    return
  }
  func.func @transform_0(%arg0: i32, %arg1: i32) -> (i32, i32, i32) {
    %c0_i32 = arith.constant 0 : i32
    %c0_i32_0 = arith.constant 0 : i32
    return %arg1, %arg0, %c0_i32 : i32, i32, i32
  }
  func.func @transform_1(%arg0: i32, %arg1: i32) -> (i32, i32) {
    %c0_i32 = arith.constant 0 : i32
    %c0_i32_0 = arith.constant 0 : i32
    %c0_i32_1 = arith.constant 0 : i32
    return %c0_i32, %c0_i32_0 : i32, i32
  }
  func.func @transform_2(%arg0: i32, %arg1: i32) -> (i32, i32) {
    %c0_i32 = arith.constant 0 : i32
    %c0_i32_0 = arith.constant 0 : i32
    %c0_i32_1 = arith.constant 0 : i32
    return %c0_i32, %c0_i32_0 : i32, i32
  }
  func.func @transform_3(%arg0: i32, %arg1: i32) -> (i32, i32) {
    %c0_i32 = arith.constant 0 : i32
    %c0_i32_0 = arith.constant 0 : i32
    %c0_i32_1 = arith.constant 0 : i32
    return %c0_i32, %c0_i32_0 : i32, i32
  }
  func.func @transform_4(%arg0: i32, %arg1: i32) -> (i32, i32) {
    %c0_i32 = arith.constant 0 : i32
    %c0_i32_0 = arith.constant 0 : i32
    %c0_i32_1 = arith.constant 0 : i32
    return %c0_i32, %c0_i32_0 : i32, i32
  }
  func.func @transform_5(%arg0: i32, %arg1: i32) -> (i32, i32) {
    %c0_i32 = arith.constant 0 : i32
    %c0_i32_0 = arith.constant 0 : i32
    return %arg0, %c0_i32 : i32, i32
  }
}

</mosaic_0001>

<llo_original>
// kernel: tpu_custom_call.1
$region0: #{tpu_custom_call.1}
  #allocation0 [shape = 'u32[]', space=smem, size = 0x4, offset = 0x4, fixed_abs, tag = 'smem constant byte address 0x4 - core index']
  #allocation1 [shape = 'u32[144,128]{1,0:T(1,128)}', space=vmem, size = 0x12000, scoped, tag = 'internal scratch']
  #allocation2 [shape = 'f32[8,128]{1,0:T(8,128)}', space=vmem, size = 0x1000, scoped, tag = 'scratch operand']
  %s0 = inlined_call_operand.hbm [shape: bf16[8,8,128], index: 0, kind: input, shape index: {}]
  %s1 = inlined_call_operand.hbm [shape: bf16[128,384], index: 1, kind: input, shape index: {}]
  %s2 = inlined_call_operand.hbm [shape: bf16[128,384], index: 2, kind: input, shape index: {}]
  %s3 = inlined_call_operand.vmem [shape: f32[1,384], index: 3, kind: input, shape index: {}]
  %s4 = inlined_call_operand.vmem [shape: f32[1,128], index: 4, kind: input, shape index: {}]
  %s5 = inlined_call_operand.hbm [shape: f32[8,128], index: 5, kind: output, shape index: {}]
  %s6 = sld [smem:[#allocation0]]
  $region50: #{tpu_custom_call.1} parent=0
    _
  %s8 = ssub.s32 1, %s6
  %s9 = scalar_select 0, %s8, %s6
  $region1: #{tpu_custom_call.1} parent=0
    #allocation3 [shape = 'u8[16384]{0}', space=vmem, size = 0x4000, scoped, tag = 'input window, operand 0, single buffered']
    #allocation4 [shape = 's32[1]{0}', space=sflag, size = 0x4, scoped, tag = 'scoped memory for tpu_custom_call.1']
    #allocation5 [shape = 's32[1]{0}', space=sflag, size = 0x4, scoped, tag = 'scoped memory for tpu_custom_call.1']
    #allocation6 [shape = 'u8[98304]{0}', space=vmem, size = 0x18000, scoped, tag = 'input window, operand 1, single buffered']
    #allocation7 [shape = 's32[1]{0}', space=sflag, size = 0x4, scoped, tag = 'scoped memory for tpu_custom_call.1']
    #allocation8 [shape = 'u8[98304]{0}', space=vmem, size = 0x18000, scoped, tag = 'input window, operand 2, single buffered']
    #allocation9 [shape = 'u8[4096]{0}', space=vmem, size = 0x1000, scoped, tag = 'output window, operand 0, single buffered']
    %10 = vsyncpa [#allocation4], 0
    %11 = vsyncpa [#allocation7], 0
    %12 = vsyncpa [#allocation5], 0
    // Predicated region
    $region2: #{tpu_custom_call.1} parent=1 // pred_check
      _
    $region3: #{tpu_custom_call.1} parent=1 // pred_check_branch
      %14 = sbr.rel (0) target = $region5
    $region4: #{tpu_custom_call.1} parent=1 // pred_region
      %s16 = ssub.s32 512, 512
      %17 = vsyncadd [#allocation4], %s16
      %s18 = sshll.u32 [#allocation3], 4
      %s19 = int_to_ptr.vmem [resolvable:$true] %s18
      %24 = dma.hbm_to_vmem [thread:$0]  %s0, 512, %s19, [#allocation4], 64, 64, 4
    $region5: #{tpu_custom_call.1} parent=1 // pred_fallthru
      _
    // Predicated region
    $region6: #{tpu_custom_call.1} parent=1 // pred_check
      _
    $region7: #{tpu_custom_call.1} parent=1 // pred_check_branch
      %26 = sbr.rel (0) target = $region9
    $region8: #{tpu_custom_call.1} parent=1 // pred_region
      %s28 = ssub.s32 3072, 3072
      %29 = vsyncadd [#allocation7], %s28
      %s30 = sshll.u32 [#allocation6], 4
      %s31 = int_to_ptr.vmem [resolvable:$true] %s30
      %36 = dma.hbm_to_vmem [thread:$0]  %s1, 3072, %s31, [#allocation7], 192, 192, 12
    $region9: #{tpu_custom_call.1} parent=1 // pred_fallthru
      _
    // Predicated region
    $region10: #{tpu_custom_call.1} parent=1 // pred_check
      _
    $region11: #{tpu_custom_call.1} parent=1 // pred_check_branch
      %38 = sbr.rel (0) target = $region13
    $region12: #{tpu_custom_call.1} parent=1 // pred_region
      %s40 = ssub.s32 3072, 3072
      %41 = vsyncadd [#allocation7], %s40
      %s42 = sshll.u32 [#allocation8], 4
      %s43 = int_to_ptr.vmem [resolvable:$true] %s42
      %48 = dma.hbm_to_vmem [thread:$0]  %s2, 3072, %s43, [#allocation7], 192, 192, 12
    $region13: #{tpu_custom_call.1} parent=1 // pred_fallthru
      _
    // Predicated region
    $region14: #{tpu_custom_call.1} parent=1 // pred_check
      _
    $region15: #{tpu_custom_call.1} parent=1 // pred_check_branch
      %50 = sbr.rel (0) target = $region17
    $region16: #{tpu_custom_call.1} parent=1 // pred_region
      _
    $region17: #{tpu_custom_call.1} parent=1 // pred_fallthru
      _
    // Predicated region
    $region18: #{tpu_custom_call.1} parent=1 // pred_check
      _
    $region19: #{tpu_custom_call.1} parent=1 // pred_check_branch
      %52 = sbr.rel (0) target = $region21
    $region20: #{tpu_custom_call.1} parent=1 // pred_region
      _
    $region21: #{tpu_custom_call.1} parent=1 // pred_fallthru
      _
    // Predicated region
    $region22: #{tpu_custom_call.1} parent=1 // pred_check
      _
    $region23: #{tpu_custom_call.1} parent=1 // pred_check_branch
      %54 = sbr.rel (0) target = $region25
    $region24: #{tpu_custom_call.1} parent=1 // pred_region
      %55 = dma.done [#allocation4], 512
    $region25: #{tpu_custom_call.1} parent=1 // pred_fallthru
      _
    // Predicated region
    $region26: #{tpu_custom_call.1} parent=1 // pred_check
      _
    $region27: #{tpu_custom_call.1} parent=1 // pred_check_branch
      %57 = sbr.rel (0) target = $region29
    $region28: #{tpu_custom_call.1} parent=1 // pred_region
      %58 = dma.done [#allocation7], 3072
    $region29: #{tpu_custom_call.1} parent=1 // pred_fallthru
      _
    // Predicated region
    $region30: #{tpu_custom_call.1} parent=1 // pred_check
      _
    $region31: #{tpu_custom_call.1} parent=1 // pred_check_branch
      %60 = sbr.rel (0) target = $region33
    $region32: #{tpu_custom_call.1} parent=1 // pred_region
      %61 = dma.done [#allocation7], 3072
    $region33: #{tpu_custom_call.1} parent=1 // pred_fallthru
      _
    %p63 = scmp.eq.s32.totalorder 0, 0
    // Predicated region
    $region34: #{tpu_custom_call.1} parent=1 // pred_check
      %p64 = pneg %p63
    $region35: #{tpu_custom_call.1} parent=1 // pred_check_branch
      %66 = sbr.rel (%p64) target = $region37
    $region36: #{tpu_custom_call.1} parent=1 // pred_region
      %67 = vst [vmem:[#allocation2] sm:$0xff] 0.0
    $region37: #{tpu_custom_call.1} parent=1 // pred_fallthru
      _
    %v68 = vld [vmem:[#allocation6] sm:$0xff]
    %v69 = vld [vmem:[#allocation6 + $0x8] sm:$0xf]
    %v70 = vld [vmem:[#allocation6 + $0xc] sm:$0xff]
    %v71 = vld [vmem:[#allocation6 + $0x14] sm:$0xf]
    %v72 = vld [vmem:[#allocation6 + $0x18] sm:$0xff]
    %v73 = vld [vmem:[#allocation6 + $0x20] sm:$0xf]
    %v74 = vld [vmem:[#allocation6 + $0x24] sm:$0xff]
    %v75 = vld [vmem:[#allocation6 + $0x2c] sm:$0xf]
    %v76 = vld [vmem:[#allocation6 + $0x30] sm:$0xff]
    %v77 = vld [vmem:[#allocation6 + $0x38] sm:$0xf]
    %v78 = vld [vmem:[#allocation6 + $0x3c] sm:$0xff]
    %v79 = vld [vmem:[#allocation6 + $0x44] sm:$0xf]
    %v80 = vld [vmem:[#allocation6 + $0x48] sm:$0xff]
    %v81 = vld [vmem:[#allocation6 + $0x50] sm:$0xf]
    %v82 = vld [vmem:[#allocation6 + $0x54] sm:$0xff]
    %v83 = vld [vmem:[#allocation6 + $0x5c] sm:$0xf]
    %v84 = vld [vmem:[#allocation6 + $0x60] sm:$0xff]
    %v85 = vld [vmem:[#allocation6 + $0x68] sm:$0xf]
    %v86 = vld [vmem:[#allocation6 + $0x6c] sm:$0xff]
    %v87 = vld [vmem:[#allocation6 + $0x74] sm:$0xf]
    %v88 = vld [vmem:[#allocation6 + $0x78] sm:$0xff]
    %v89 = vld [vmem:[#allocation6 + $0x80] sm:$0xf]
    %v90 = vld [vmem:[#allocation6 + $0x84] sm:$0xff]
    %v91 = vld [vmem:[#allocation6 + $0x8c] sm:$0xf]
    %v92 = vld [vmem:[#allocation6 + $0x90] sm:$0xff]
    %v93 = vld [vmem:[#allocation6 + $0x98] sm:$0xf]
    %v94 = vld [vmem:[#allocation6 + $0x9c] sm:$0xff]
    %v95 = vld [vmem:[#allocation6 + $0xa4] sm:$0xf]
    %v96 = vld [vmem:[#allocation6 + $0xa8] sm:$0xff]
    %v97 = vld [vmem:[#allocation6 + $0xb0] sm:$0xf]
    %v98 = vld [vmem:[#allocation6 + $0xb4] sm:$0xff]
    %v99 = vld [vmem:[#allocation6 + $0xbc] sm:$0xf]
    %v100 = vld [vmem:[#allocation8] sm:$0xff]
    %v101 = vld [vmem:[#allocation8 + $0x8] sm:$0xf]
    %v102 = vld [vmem:[#allocation8 + $0xc] sm:$0xff]
    %v103 = vld [vmem:[#allocation8 + $0x14] sm:$0xf]
    %v104 = vld [vmem:[#allocation8 + $0x18] sm:$0xff]
    %v105 = vld [vmem:[#allocation8 + $0x20] sm:$0xf]
    %v106 = vld [vmem:[#allocation8 + $0x24] sm:$0xff]
    %v107 = vld [vmem:[#allocation8 + $0x2c] sm:$0xf]
    %v108 = vld [vmem:[#allocation8 + $0x30] sm:$0xff]
    %v109 = vld [vmem:[#allocation8 + $0x38] sm:$0xf]
    %v110 = vld [vmem:[#allocation8 + $0x3c] sm:$0xff]
    %v111 = vld [vmem:[#allocation8 + $0x44] sm:$0xf]
    %v112 = vld [vmem:[#allocation8 + $0x48] sm:$0xff]
    %v113 = vld [vmem:[#allocation8 + $0x50] sm:$0xf]
    %v114 = vld [vmem:[#allocation8 + $0x54] sm:$0xff]
    %v115 = vld [vmem:[#allocation8 + $0x5c] sm:$0xf]
    %v116 = vld [vmem:[#allocation8 + $0x60] sm:$0xff]
    %v117 = vld [vmem:[#allocation8 + $0x68] sm:$0xf]
    %v118 = vld [vmem:[#allocation8 + $0x6c] sm:$0xff]
    %v119 = vld [vmem:[#allocation8 + $0x74] sm:$0xf]
    %v120 = vld [vmem:[#allocation8 + $0x78] sm:$0xff]
    %v121 = vld [vmem:[#allocation8 + $0x80] sm:$0xf]
    %v122 = vld [vmem:[#allocation8 + $0x84] sm:$0xff]
    %v123 = vld [vmem:[#allocation8 + $0x8c] sm:$0xf]
    %v124 = vld [vmem:[#allocation8 + $0x90] sm:$0xff]
    %v125 = vld [vmem:[#allocation8 + $0x98] sm:$0xf]
    %v126 = vld [vmem:[#allocation8 + $0x9c] sm:$0xff]
    %v127 = vld [vmem:[#allocation8 + $0xa4] sm:$0xf]
    %v128 = vld [vmem:[#allocation8 + $0xa8] sm:$0xff]
    %v129 = vld [vmem:[#allocation8 + $0xb0] sm:$0xf]
    %v130 = vld [vmem:[#allocation8 + $0xb4] sm:$0xff]
    %v131 = vld [vmem:[#allocation8 + $0xbc] sm:$0xf]
    %v132 = vld [vmem:[%s3] sm:$0x7]
    %v133 = vld [vmem:[%s4] sm:$0x1]
    %v134 = vld [vmem:[#allocation2] sm:$0xff]
    %v135 = vld [vmem:[#allocation3] sm:$0xf]
    %v136 = vld [vmem:[#allocation3 + $0x4] sm:$0xf]
    %v137 = vld [vmem:[#allocation3 + $0x8] sm:$0xf]
    %v138 = vld [vmem:[#allocation3 + $0xc] sm:$0xf]
    %v139 = vld [vmem:[#allocation3 + $0x10] sm:$0xf]
    %v140 = vld [vmem:[#allocation3 + $0x14] sm:$0xf]
    %v141 = vld [vmem:[#allocation3 + $0x18] sm:$0xf]
    %v142 = vld [vmem:[#allocation3 + $0x1c] sm:$0xf]
    %v144 = vlaneseq
    %v145 = vshrl.u32 %v144, 7
    %v146 = vsub.s32 0, %v145
    %v147 = vrot.slane %v132, %v146
    %v148 = vlaneseq
    %v149 = vshrl.u32 %v148, 7
    %v150 = vsub.s32 1, %v149
    %v151 = vrot.slane %v132, %v150
    %v152 = vlaneseq
    %v153 = vshrl.u32 %v152, 7
    %v154 = vsub.s32 2, %v153
    %v155 = vrot.slane %v132, %v154
    %v167 = vunpack.c.l.b16 %v135
    %v168 = vunpack.c.l.b16 %v136
    %v169 = vunpack.c.l.b16 %v137
    %v170 = vunpack.c.l.b16 %v138
    %v171 = vunpack.c.l.b16 %v139
    %v172 = vunpack.c.l.b16 %v140
    %v173 = vunpack.c.l.b16 %v141
    %v174 = vunpack.c.l.b16 %v142
    %v175 = vpack.c.b16 %v168, %v167
    %v176 = vpack.c.b16 %v170, %v169
    %v177 = vpack.c.b16 %v172, %v171
    %v178 = vpack.c.b16 %v174, %v173
    %v215 = vunpack.c.l.b16 %v68
    %v216 = vunpack.c.h.b16 %v68
    %v217 = vunpack.c.l.b16 %v69
    %v218 = vunpack.c.l.b16 %v70
    %v219 = vunpack.c.h.b16 %v70
    %v220 = vunpack.c.l.b16 %v71
    %v221 = vunpack.c.l.b16 %v72
    %v222 = vunpack.c.h.b16 %v72
    %v223 = vunpack.c.l.b16 %v73
    %v224 = vunpack.c.l.b16 %v74
    %v225 = vunpack.c.h.b16 %v74
    %v226 = vunpack.c.l.b16 %v75
    %v227 = vunpack.c.l.b16 %v76
    %v228 = vunpack.c.h.b16 %v76
    %v229 = vunpack.c.l.b16 %v77
    %v230 = vunpack.c.l.b16 %v78
    %v231 = vunpack.c.h.b16 %v78
    %v232 = vunpack.c.l.b16 %v79
    %v233 = vunpack.c.l.b16 %v80
    %v234 = vunpack.c.h.b16 %v80
    %v235 = vunpack.c.l.b16 %v81
    %v236 = vunpack.c.l.b16 %v82
    %v237 = vunpack.c.h.b16 %v82
    %v238 = vunpack.c.l.b16 %v83
    %v239 = vunpack.c.l.b16 %v84
    %v240 = vunpack.c.h.b16 %v84
    %v241 = vunpack.c.l.b16 %v85
    %v242 = vunpack.c.l.b16 %v86
    %v243 = vunpack.c.h.b16 %v86
    %v244 = vunpack.c.l.b16 %v87
    %v245 = vunpack.c.l.b16 %v88
    %v246 = vunpack.c.h.b16 %v88
    %v247 = vunpack.c.l.b16 %v89
    %v248 = vunpack.c.l.b16 %v90
    %v249 = vunpack.c.h.b16 %v90
    %v250 = vunpack.c.l.b16 %v91
    %v251 = vunpack.c.l.b16 %v92
    %v252 = vunpack.c.h.b16 %v92
    %v253 = vunpack.c.l.b16 %v93
    %v254 = vunpack.c.l.b16 %v94
    %v255 = vunpack.c.h.b16 %v94
    %v256 = vunpack.c.l.b16 %v95
    %v257 = vunpack.c.l.b16 %v96
    %v258 = vunpack.c.h.b16 %v96
    %v259 = vunpack.c.l.b16 %v97
    %v260 = vunpack.c.l.b16 %v98
    %v261 = vunpack.c.h.b16 %v98
    %v262 = vunpack.c.l.b16 %v99
    %v263 = vpack.c.b16 %v218, %v215
    %v264 = vpack.c.b16 %v219, %v216
    %v265 = vpack.c.b16 %v220, %v217
    %v266 = vpack.c.b16 %v224, %v221
    %v267 = vpack.c.b16 %v225, %v222
    %v268 = vpack.c.b16 %v226, %v223
    %v269 = vpack.c.b16 %v230, %v227
    %v270 = vpack.c.b16 %v231, %v228
    %v271 = vpack.c.b16 %v232, %v229
    %v272 = vpack.c.b16 %v236, %v233
    %v273 = vpack.c.b16 %v237, %v234
    %v274 = vpack.c.b16 %v238, %v235
    %v275 = vpack.c.b16 %v242, %v239
    %v276 = vpack.c.b16 %v243, %v240
    %v277 = vpack.c.b16 %v244, %v241
    %v278 = vpack.c.b16 %v248, %v245
    %v279 = vpack.c.b16 %v249, %v246
    %v280 = vpack.c.b16 %v250, %v247
    %v281 = vpack.c.b16 %v254, %v251
    %v282 = vpack.c.b16 %v255, %v252
    %v283 = vpack.c.b16 %v256, %v253
    %v284 = vpack.c.b16 %v260, %v257
    %v285 = vpack.c.b16 %v261, %v258
    %v286 = vpack.c.b16 %v262, %v259
    %311 = vmatprep.subr.bf16.mxu0 %v285
    %312 = vmatpush1.bf16.msra.mxu0 %v284
    %313 = vmatprep.subr.bf16.mxu0 %v282
    %314 = vmatpush1.bf16.msra.mxu0 %v281
    %315 = vmatprep.subr.bf16.mxu0 %v279
    %316 = vmatpush1.bf16.msra.mxu0 %v278
    %317 = vmatprep.subr.bf16.mxu0 %v276
    %318 = vmatpush1.bf16.msra.mxu0 %v275
    %319 = vmatprep.subr.bf16.mxu0 %v273
    %320 = vmatpush1.bf16.msra.mxu0 %v272
    %321 = vmatprep.subr.bf16.mxu0 %v270
    %322 = vmatpush1.bf16.msra.mxu0 %v269
    %323 = vmatprep.subr.bf16.mxu0 %v267
    %324 = vmatpush1.bf16.msra.mxu0 %v266
    %325 = vmatprep.subr.bf16.mxu0 %v264
    %326 = vmatpush1.bf16.msra.mxu0 %v263
    %327 = vmatprep.subr.bf16.mxu0 0
    %328 = vmatpush2.bf16.msra.mxu0 0
    %329 = vmatprep.subr.bf16.mxu0 0
    %330 = vmatpush2.bf16.msra.mxu0 0
    %331 = vmatprep.subr.bf16.mxu0 0
    %332 = vmatpush2.bf16.msra.mxu0 0
    %333 = vmatprep.subr.bf16.mxu0 0
    %334 = vmatpush2.bf16.msra.mxu0 0
    %335 = vmatprep.subr.bf16.mxu0 0
    %336 = vmatpush2.bf16.msra.mxu0 0
    %337 = vmatprep.subr.bf16.mxu0 0
    %338 = vmatpush2.bf16.msra.mxu0 0
    %339 = vmatprep.subr.bf16.mxu0 0
    %340 = vmatpush2.bf16.msra.mxu0 0
    %341 = vmatprep.subr.bf16.mxu0 0
    %342 = vmatpush2.bf16.msra.mxu0 0
    %343 = vmatprep.mubr.bf16.mxu0 0
    %344 = vmatmul.mubr.bf16.gmra.mxu0 %v175
    %v345 = vpop.f32.mrf.mxu0
    %v346 = vadd.f32 %v147, %v345
    %v347 = vpop.f32.mrf.mxu0
    %v348 = vadd.f32 %v151, %v347
    %v349 = vpop.f32.mrf.mxu0
    %v350 = vadd.f32 %v147, %v349
    %v351 = vpop.f32.mrf.mxu0
    %v352 = vadd.f32 %v151, %v351
    %353 = vmatprep.mubr.bf16.mxu0 0
    %354 = vmatmul.mubr.bf16.gmra.mxu0 %v176
    %v355 = vpop.f32.mrf.mxu0
    %v356 = vadd.f32 %v147, %v355
    %v357 = vpop.f32.mrf.mxu0
    %v358 = vadd.f32 %v151, %v357
    %v359 = vpop.f32.mrf.mxu0
    %v360 = vadd.f32 %v147, %v359
    %v361 = vpop.f32.mrf.mxu0
    %v362 = vadd.f32 %v151, %v361
    %363 = vmatprep.mubr.bf16.mxu0 0
    %364 = vmatmul.mubr.bf16.gmra.mxu0 %v177
    %v365 = vpop.f32.mrf.mxu0
    %v366 = vadd.f32 %v147, %v365
    %v367 = vpop.f32.mrf.mxu0
    %v368 = vadd.f32 %v151, %v367
    %v369 = vpop.f32.mrf.mxu0
    %v370 = vadd.f32 %v147, %v369
    %v371 = vpop.f32.mrf.mxu0
    %v372 = vadd.f32 %v151, %v371
    %373 = vmatprep.mubr.bf16.mxu0 0
    %374 = vmatmul.mubr.bf16.gmra.mxu0 %v178
    %v375 = vpop.f32.mrf.mxu0
    %v376 = vadd.f32 %v147, %v375
    %v377 = vpop.f32.mrf.mxu0
    %v378 = vadd.f32 %v151, %v377
    %v379 = vpop.f32.mrf.mxu0
    %v380 = vadd.f32 %v147, %v379
    %v381 = vpop.f32.mrf.mxu0
    %v382 = vadd.f32 %v151, %v381
    %383 = vdwg.mxu0
    %384 = vmatprep.subr.bf16.mxu0 0
    %385 = vmatpush1.bf16.msra.mxu0 %v286
    %386 = vmatprep.subr.bf16.mxu0 0
    %387 = vmatpush1.bf16.msra.mxu0 %v283
    %388 = vmatprep.subr.bf16.mxu0 0
    %389 = vmatpush1.bf16.msra.mxu0 %v280
    %390 = vmatprep.subr.bf16.mxu0 0
    %391 = vmatpush1.bf16.msra.mxu0 %v277
    %392 = vmatprep.subr.bf16.mxu0 0
    %393 = vmatpush1.bf16.msra.mxu0 %v274
    %394 = vmatprep.subr.bf16.mxu0 0
    %395 = vmatpush1.bf16.msra.mxu0 %v271
    %396 = vmatprep.subr.bf16.mxu0 0
    %397 = vmatpush1.bf16.msra.mxu0 %v268
    %398 = vmatprep.subr.bf16.mxu0 0
    %399 = vmatpush1.bf16.msra.mxu0 %v265
    %400 = vmatprep.subr.bf16.mxu0 0
    %401 = vmatpush2.bf16.msra.mxu0 0
    %402 = vmatprep.subr.bf16.mxu0 0
    %403 = vmatpush2.bf16.msra.mxu0 0
    %404 = vmatprep.subr.bf16.mxu0 0
    %405 = vmatpush2.bf16.msra.mxu0 0
    %406 = vmatprep.subr.bf16.mxu0 0
    %407 = vmatpush2.bf16.msra.mxu0 0
    %408 = vmatprep.subr.bf16.mxu0 0
    %409 = vmatpush2.bf16.msra.mxu0 0
    %410 = vmatprep.subr.bf16.mxu0 0
    %411 = vmatpush2.bf16.msra.mxu0 0
    %412 = vmatprep.subr.bf16.mxu0 0
    %413 = vmatpush2.bf16.msra.mxu0 0
    %414 = vmatprep.subr.bf16.mxu0 0
    %415 = vmatpush2.bf16.msra.mxu0 0
    %416 = vmatprep.mubr.bf16.mxu0 0
    %417 = vmatmul.mubr.bf16.gmra.mxu0 %v175
    %v418 = vpop.f32.mrf.mxu0
    %v419 = vadd.f32 %v155, %v418
    %v420 = vpop.f32.mrf.mxu0
    %v421 = vpop.f32.mrf.mxu0
    %v422 = vadd.f32 %v155, %v421
    %v423 = vpop.f32.mrf.mxu0
    %424 = vmatprep.mubr.bf16.mxu0 0
    %425 = vmatmul.mubr.bf16.gmra.mxu0 %v176
    %v426 = vpop.f32.mrf.mxu0
    %v427 = vadd.f32 %v155, %v426
    %v428 = vpop.f32.mrf.mxu0
    %v429 = vpop.f32.mrf.mxu0
    %v430 = vadd.f32 %v155, %v429
    %v431 = vpop.f32.mrf.mxu0
    %432 = vmatprep.mubr.bf16.mxu0 0
    %433 = vmatmul.mubr.bf16.gmra.mxu0 %v177
    %v434 = vpop.f32.mrf.mxu0
    %v435 = vadd.f32 %v155, %v434
    %v436 = vpop.f32.mrf.mxu0
    %v437 = vpop.f32.mrf.mxu0
    %v438 = vadd.f32 %v155, %v437
    %v439 = vpop.f32.mrf.mxu0
    %440 = vmatprep.mubr.bf16.mxu0 0
    %441 = vmatmul.mubr.bf16.gmra.mxu0 %v178
    %v442 = vpop.f32.mrf.mxu0
    %v443 = vadd.f32 %v155, %v442
    %v444 = vpop.f32.mrf.mxu0
    %v445 = vpop.f32.mrf.mxu0
    %v446 = vadd.f32 %v155, %v445
    %v447 = vpop.f32.mrf.mxu0
    %448 = vdwg.mxu0
    %v449 = vpack.c.bf16 %v134, %v134
    %v482 = vunpack.c.l.b16 %v100
    %v483 = vunpack.c.h.b16 %v100
    %v484 = vunpack.c.l.b16 %v101
    %v485 = vunpack.c.l.b16 %v102
    %v486 = vunpack.c.h.b16 %v102
    %v487 = vunpack.c.l.b16 %v103
    %v488 = vunpack.c.l.b16 %v104
    %v489 = vunpack.c.h.b16 %v104
    %v490 = vunpack.c.l.b16 %v105
    %v491 = vunpack.c.l.b16 %v106
    %v492 = vunpack.c.h.b16 %v106
    %v493 = vunpack.c.l.b16 %v107
    %v494 = vunpack.c.l.b16 %v108
    %v495 = vunpack.c.h.b16 %v108
    %v496 = vunpack.c.l.b16 %v109
    %v497 = vunpack.c.l.b16 %v110
    %v498 = vunpack.c.h.b16 %v110
    %v499 = vunpack.c.l.b16 %v111
    %v500 = vunpack.c.l.b16 %v112
    %v501 = vunpack.c.h.b16 %v112
    %v502 = vunpack.c.l.b16 %v113
    %v503 = vunpack.c.l.b16 %v114
    %v504 = vunpack.c.h.b16 %v114
    %v505 = vunpack.c.l.b16 %v115
    %v506 = vunpack.c.l.b16 %v116
    %v507 = vunpack.c.h.b16 %v116
    %v508 = vunpack.c.l.b16 %v117
    %v509 = vunpack.c.l.b16 %v118
    %v510 = vunpack.c.h.b16 %v118
    %v511 = vunpack.c.l.b16 %v119
    %v512 = vunpack.c.l.b16 %v120
    %v513 = vunpack.c.h.b16 %v120
    %v514 = vunpack.c.l.b16 %v121
    %v515 = vunpack.c.l.b16 %v122
    %v516 = vunpack.c.h.b16 %v122
    %v517 = vunpack.c.l.b16 %v123
    %v518 = vunpack.c.l.b16 %v124
    %v519 = vunpack.c.h.b16 %v124
    %v520 = vunpack.c.l.b16 %v125
    %v521 = vunpack.c.l.b16 %v126
    %v522 = vunpack.c.h.b16 %v126
    %v523 = vunpack.c.l.b16 %v127
    %v524 = vunpack.c.l.b16 %v128
    %v525 = vunpack.c.h.b16 %v128
    %v526 = vunpack.c.l.b16 %v129
    %v527 = vunpack.c.l.b16 %v130
    %v528 = vunpack.c.h.b16 %v130
    %v529 = vunpack.c.l.b16 %v131
    %v530 = vpack.c.b16 %v485, %v482
    %v531 = vpack.c.b16 %v486, %v483
    %v532 = vpack.c.b16 %v487, %v484
    %v533 = vpack.c.b16 %v491, %v488
    %v534 = vpack.c.b16 %v492, %v489
    %v535 = vpack.c.b16 %v493, %v490
    %v536 = vpack.c.b16 %v497, %v494
    %v537 = vpack.c.b16 %v498, %v495
    %v538 = vpack.c.b16 %v499, %v496
    %v539 = vpack.c.b16 %v503, %v500
    %v540 = vpack.c.b16 %v504, %v501
    %v541 = vpack.c.b16 %v505, %v502
    %v542 = vpack.c.b16 %v509, %v506
    %v543 = vpack.c.b16 %v510, %v507
    %v544 = vpack.c.b16 %v511, %v508
    %v545 = vpack.c.b16 %v515, %v512
    %v546 = vpack.c.b16 %v516, %v513
    %v547 = vpack.c.b16 %v517, %v514
    %v548 = vpack.c.b16 %v521, %v518
    %v549 = vpack.c.b16 %v522, %v519
    %v550 = vpack.c.b16 %v523, %v520
    %v551 = vpack.c.b16 %v527, %v524
    %v552 = vpack.c.b16 %v528, %v525
    %v553 = vpack.c.b16 %v529, %v526
    %578 = vmatprep.subr.bf16.mxu0 %v552
    %579 = vmatpush1.bf16.msra.mxu0 %v551
    %580 = vmatprep.subr.bf16.mxu0 %v549
    %581 = vmatpush1.bf16.msra.mxu0 %v548
    %582 = vmatprep.subr.bf16.mxu0 %v546
    %583 = vmatpush1.bf16.msra.mxu0 %v545
    %584 = vmatprep.subr.bf16.mxu0 %v543
    %585 = vmatpush1.bf16.msra.mxu0 %v542
    %586 = vmatprep.subr.bf16.mxu0 %v540
    %587 = vmatpush1.bf16.msra.mxu0 %v539
    %588 = vmatprep.subr.bf16.mxu0 %v537
    %589 = vmatpush1.bf16.msra.mxu0 %v536
    %590 = vmatprep.subr.bf16.mxu0 %v534
    %591 = vmatpush1.bf16.msra.mxu0 %v533
    %592 = vmatprep.subr.bf16.mxu0 %v531
    %593 = vmatpush1.bf16.msra.mxu0 %v530
    %594 = vmatprep.subr.bf16.mxu0 0
    %595 = vmatpush2.bf16.msra.mxu0 0
    %596 = vmatprep.subr.bf16.mxu0 0
    %597 = vmatpush2.bf16.msra.mxu0 0
    %598 = vmatprep.subr.bf16.mxu0 0
    %599 = vmatpush2.bf16.msra.mxu0 0
    %600 = vmatprep.subr.bf16.mxu0 0
    %601 = vmatpush2.bf16.msra.mxu0 0
    %602 = vmatprep.subr.bf16.mxu0 0
    %603 = vmatpush2.bf16.msra.mxu0 0
    %604 = vmatprep.subr.bf16.mxu0 0
    %605 = vmatpush2.bf16.msra.mxu0 0
    %606 = vmatprep.subr.bf16.mxu0 0
    %607 = vmatpush2.bf16.msra.mxu0 0
    %608 = vmatprep.subr.bf16.mxu0 0
    %609 = vmatpush2.bf16.msra.mxu0 0
    %610 = vmatprep.mubr.bf16.mxu0 0
    %611 = vmatmul.mubr.bf16.gmra.mxu0 %v449
    %v612 = vpop.f32.mrf.mxu0
    %v613 = vadd.f32 0.0, %v612
    %v614 = vpop.f32.mrf.mxu0
    %v615 = vadd.f32 0.0, %v614
    %v616 = vpop.f32.mrf.mxu0
    %v617 = vpop.f32.mrf.mxu0
    %618 = vdwg.mxu0
    %619 = vmatprep.subr.bf16.mxu0 0
    %620 = vmatpush1.bf16.msra.mxu0 %v553
    %621 = vmatprep.subr.bf16.mxu0 0
    %622 = vmatpush1.bf16.msra.mxu0 %v550
    %623 = vmatprep.subr.bf16.mxu0 0
    %624 = vmatpush1.bf16.msra.mxu0 %v547
    %625 = vmatprep.subr.bf16.mxu0 0
    %626 = vmatpush1.bf16.msra.mxu0 %v544
    %627 = vmatprep.subr.bf16.mxu0 0
    %628 = vmatpush1.bf16.msra.mxu0 %v541
    %629 = vmatprep.subr.bf16.mxu0 0
    %630 = vmatpush1.bf16.msra.mxu0 %v538
    %631 = vmatprep.subr.bf16.mxu0 0
    %632 = vmatpush1.bf16.msra.mxu0 %v535
    %633 = vmatprep.subr.bf16.mxu0 0
    %634 = vmatpush1.bf16.msra.mxu0 %v532
    %635 = vmatprep.subr.bf16.mxu0 0
    %636 = vmatpush2.bf16.msra.mxu0 0
    %637 = vmatprep.subr.bf16.mxu0 0
    %638 = vmatpush2.bf16.msra.mxu0 0
    %639 = vmatprep.subr.bf16.mxu0 0
    %640 = vmatpush2.bf16.msra.mxu0 0
    %641 = vmatprep.subr.bf16.mxu0 0
    %642 = vmatpush2.bf16.msra.mxu0 0
    %643 = vmatprep.subr.bf16.mxu0 0
    %644 = vmatpush2.bf16.msra.mxu0 0
    %645 = vmatprep.subr.bf16.mxu0 0
    %646 = vmatpush2.bf16.msra.mxu0 0
    %647 = vmatprep.subr.bf16.mxu0 0
    %648 = vmatpush2.bf16.msra.mxu0 0
    %649 = vmatprep.subr.bf16.mxu0 0
    %650 = vmatpush2.bf16.msra.mxu0 0
    %651 = vmatprep.mubr.bf16.mxu0 0
    %652 = vmatmul.mubr.bf16.gmra.mxu0 %v449
    %v653 = vpop.f32.mrf.mxu0
    %v654 = vadd.f32 0.0, %v653
    %v655 = vpop.f32.mrf.mxu0
    %v656 = vpop.f32.mrf.mxu0
    %v657 = vpop.f32.mrf.mxu0
    %658 = vdwg.mxu0
    %v659 = vadd.f32 %v346, %v613
    %v660 = vxor.u32 %v659, 2147483648
    %v661 = vmul.f32 %v660, 1.442695
    %v662 = vpow.pop %v661
    %v663 = vadd.f32 %v662, 1.0
    %v664 = vrcp.pop %v663
    %v665 = vmul.f32 1.0, %v664
    %v666 = vadd.f32 %v348, %v615
    %v667 = vxor.u32 %v666, 2147483648
    %v668 = vmul.f32 %v667, 1.442695
    %v669 = vpow.pop %v668
    %v670 = vadd.f32 %v669, 1.0
    %v671 = vrcp.pop %v670
    %v672 = vmul.f32 1.0, %v671
    %v674 = vlaneseq
    %v675 = vshrl.u32 %v674, 7
    %v676 = vsub.s32 0, %v675
    %v677 = vrot.slane %v133, %v676
    %v679 = vadd.f32 %v654, %v677
    %v680 = vmul.f32 %v665, %v679
    %v681 = vadd.f32 %v419, %v680
    %v682 = vtanh.pop %v681
    %v683 = vsub.f32 1.0, %v672
    %v684 = vmul.f32 %v683, %v682
    %v685 = vmul.f32 %v672, %v134
    %v686 = vadd.f32 %v684, %v685
    %v687 = vpack.c.bf16 %v686, %v686
    %688 = vmatprep.subr.bf16.mxu0 %v552
    %689 = vmatpush1.bf16.msra.mxu0 %v551
    %690 = vmatprep.subr.bf16.mxu0 %v549
    %691 = vmatpush1.bf16.msra.mxu0 %v548
    %692 = vmatprep.subr.bf16.mxu0 %v546
    %693 = vmatpush1.bf16.msra.mxu0 %v545
    %694 = vmatprep.subr.bf16.mxu0 %v543
    %695 = vmatpush1.bf16.msra.mxu0 %v542
    %696 = vmatprep.subr.bf16.mxu0 %v540
    %697 = vmatpush1.bf16.msra.mxu0 %v539
    %698 = vmatprep.subr.bf16.mxu0 %v537
    %699 = vmatpush1.bf16.msra.mxu0 %v536
    %700 = vmatprep.subr.bf16.mxu0 %v534
    %701 = vmatpush1.bf16.msra.mxu0 %v533
    %702 = vmatprep.subr.bf16.mxu0 %v531
    %703 = vmatpush1.bf16.msra.mxu0 %v530
    %704 = vmatprep.subr.bf16.mxu0 0
    %705 = vmatpush2.bf16.msra.mxu0 0
    %706 = vmatprep.subr.bf16.mxu0 0
    %707 = vmatpush2.bf16.msra.mxu0 0
    %708 = vmatprep.subr.bf16.mxu0 0
    %709 = vmatpush2.bf16.msra.mxu0 0
    %710 = vmatprep.subr.bf16.mxu0 0
    %711 = vmatpush2.bf16.msra.mxu0 0
    %712 = vmatprep.subr.bf16.mxu0 0
    %713 = vmatpush2.bf16.msra.mxu0 0
    %714 = vmatprep.subr.bf16.mxu0 0
    %715 = vmatpush2.bf16.msra.mxu0 0
    %716 = vmatprep.subr.bf16.mxu0 0
    %717 = vmatpush2.bf16.msra.mxu0 0
    %718 = vmatprep.subr.bf16.mxu0 0
    %719 = vmatpush2.bf16.msra.mxu0 0
    %720 = vmatprep.mubr.bf16.mxu0 0
    %721 = vmatmul.mubr.bf16.gmra.mxu0 %v687
    %v722 = vpop.f32.mrf.mxu0
    %v723 = vadd.f32 0.0, %v722
    %v724 = vpop.f32.mrf.mxu0
    %v725 = vadd.f32 0.0, %v724
    %v726 = vpop.f32.mrf.mxu0
    %v727 = vpop.f32.mrf.mxu0
    %728 = vdwg.mxu0
    %729 = vmatprep.subr.bf16.mxu0 0
    %730 = vmatpush1.bf16.msra.mxu0 %v553
    %731 = vmatprep.subr.bf16.mxu0 0
    %732 = vmatpush1.bf16.msra.mxu0 %v550
    %733 = vmatprep.subr.bf16.mxu0 0
    %734 = vmatpush1.bf16.msra.mxu0 %v547
    %735 = vmatprep.subr.bf16.mxu0 0
    %736 = vmatpush1.bf16.msra.mxu0 %v544
    %737 = vmatprep.subr.bf16.mxu0 0
    %738 = vmatpush1.bf16.msra.mxu0 %v541
    %739 = vmatprep.subr.bf16.mxu0 0
    %740 = vmatpush1.bf16.msra.mxu0 %v538
    %741 = vmatprep.subr.bf16.mxu0 0
    %742 = vmatpush1.bf16.msra.mxu0 %v535
    %743 = vmatprep.subr.bf16.mxu0 0
    %744 = vmatpush1.bf16.msra.mxu0 %v532
    %745 = vmatprep.subr.bf16.mxu0 0
    %746 = vmatpush2.bf16.msra.mxu0 0
    %747 = vmatprep.subr.bf16.mxu0 0
    %748 = vmatpush2.bf16.msra.mxu0 0
    %749 = vmatprep.subr.bf16.mxu0 0
    %750 = vmatpush2.bf16.msra.mxu0 0
    %751 = vmatprep.subr.bf16.mxu0 0
    %752 = vmatpush2.bf16.msra.mxu0 0
    %753 = vmatprep.subr.bf16.mxu0 0
    %754 = vmatpush2.bf16.msra.mxu0 0
    %755 = vmatprep.subr.bf16.mxu0 0
    %756 = vmatpush2.bf16.msra.mxu0 0
    %757 = vmatprep.subr.bf16.mxu0 0
    %758 = vmatpush2.bf16.msra.mxu0 0
    %759 = vmatprep.subr.bf16.mxu0 0
    %760 = vmatpush2.bf16.msra.mxu0 0
    %761 = vmatprep.mubr.bf16.mxu0 0
    %762 = vmatmul.mubr.bf16.gmra.mxu0 %v687
    %v763 = vpop.f32.mrf.mxu0
    %v764 = vadd.f32 0.0, %v763
    %v765 = vpop.f32.mrf.mxu0
    %v766 = vpop.f32.mrf.mxu0
    %v767 = vpop.f32.mrf.mxu0
    %768 = vdwg.mxu0
    %v769 = vadd.f32 %v350, %v723
    %v770 = vxor.u32 %v769, 2147483648
    %v771 = vmul.f32 %v770, 1.442695
    %v772 = vpow.pop %v771
    %v773 = vadd.f32 %v772, 1.0
    %v774 = vrcp.pop %v773
    %v775 = vmul.f32 1.0, %v774
    %v776 = vadd.f32 %v352, %v725
    %v777 = vxor.u32 %v776, 2147483648
    %v778 = vmul.f32 %v777, 1.442695
    %v779 = vpow.pop %v778
    %v780 = vadd.f32 %v779, 1.0
    %v781 = vrcp.pop %v780
    %v782 = vmul.f32 1.0, %v781
    %v783 = vadd.f32 %v764, %v677
    %v784 = vmul.f32 %v775, %v783
    %v785 = vadd.f32 %v422, %v784
    %v786 = vtanh.pop %v785
    %v787 = vsub.f32 1.0, %v782
    %v788 = vmul.f32 %v787, %v786
    %v789 = vmul.f32 %v782, %v686
    %v790 = vadd.f32 %v788, %v789
    %v791 = vpack.c.bf16 %v790, %v790
    %792 = vmatprep.subr.bf16.mxu0 %v552
    %793 = vmatpush1.bf16.msra.mxu0 %v551
    %794 = vmatprep.subr.bf16.mxu0 %v549
    %795 = vmatpush1.bf16.msra.mxu0 %v548
    %796 = vmatprep.subr.bf16.mxu0 %v546
    %797 = vmatpush1.bf16.msra.mxu0 %v545
    %798 = vmatprep.subr.bf16.mxu0 %v543
    %799 = vmatpush1.bf16.msra.mxu0 %v542
    %800 = vmatprep.subr.bf16.mxu0 %v540
    %801 = vmatpush1.bf16.msra.mxu0 %v539
    %802 = vmatprep.subr.bf16.mxu0 %v537
    %803 = vmatpush1.bf16.msra.mxu0 %v536
    %804 = vmatprep.subr.bf16.mxu0 %v534
    %805 = vmatpush1.bf16.msra.mxu0 %v533
    %806 = vmatprep.subr.bf16.mxu0 %v531
    %807 = vmatpush1.bf16.msra.mxu0 %v530
    %808 = vmatprep.subr.bf16.mxu0 0
    %809 = vmatpush2.bf16.msra.mxu0 0
    %810 = vmatprep.subr.bf16.mxu0 0
    %811 = vmatpush2.bf16.msra.mxu0 0
    %812 = vmatprep.subr.bf16.mxu0 0
    %813 = vmatpush2.bf16.msra.mxu0 0
    %814 = vmatprep.subr.bf16.mxu0 0
    %815 = vmatpush2.bf16.msra.mxu0 0
    %816 = vmatprep.subr.bf16.mxu0 0
    %817 = vmatpush2.bf16.msra.mxu0 0
    %818 = vmatprep.subr.bf16.mxu0 0
    %819 = vmatpush2.bf16.msra.mxu0 0
    %820 = vmatprep.subr.bf16.mxu0 0
    %821 = vmatpush2.bf16.msra.mxu0 0
    %822 = vmatprep.subr.bf16.mxu0 0
    %823 = vmatpush2.bf16.msra.mxu0 0
    %824 = vmatprep.mubr.bf16.mxu0 0
    %825 = vmatmul.mubr.bf16.gmra.mxu0 %v791
    %v826 = vpop.f32.mrf.mxu0
    %v827 = vadd.f32 0.0, %v826
    %v828 = vpop.f32.mrf.mxu0
    %v829 = vadd.f32 0.0, %v828
    %v830 = vpop.f32.mrf.mxu0
    %v831 = vpop.f32.mrf.mxu0
    %832 = vdwg.mxu0
    %833 = vmatprep.subr.bf16.mxu0 0
    %834 = vmatpush1.bf16.msra.mxu0 %v553
    %835 = vmatprep.subr.bf16.mxu0 0
    %836 = vmatpush1.bf16.msra.mxu0 %v550
    %837 = vmatprep.subr.bf16.mxu0 0
    %838 = vmatpush1.bf16.msra.mxu0 %v547
    %839 = vmatprep.subr.bf16.mxu0 0
    %840 = vmatpush1.bf16.msra.mxu0 %v544
    %841 = vmatprep.subr.bf16.mxu0 0
    %842 = vmatpush1.bf16.msra.mxu0 %v541
    %843 = vmatprep.subr.bf16.mxu0 0
    %844 = vmatpush1.bf16.msra.mxu0 %v538
    %845 = vmatprep.subr.bf16.mxu0 0
    %846 = vmatpush1.bf16.msra.mxu0 %v535
    %847 = vmatprep.subr.bf16.mxu0 0
    %848 = vmatpush1.bf16.msra.mxu0 %v532
    %849 = vmatprep.subr.bf16.mxu0 0
    %850 = vmatpush2.bf16.msra.mxu0 0
    %851 = vmatprep.subr.bf16.mxu0 0
    %852 = vmatpush2.bf16.msra.mxu0 0
    %853 = vmatprep.subr.bf16.mxu0 0
    %854 = vmatpush2.bf16.msra.mxu0 0
    %855 = vmatprep.subr.bf16.mxu0 0
    %856 = vmatpush2.bf16.msra.mxu0 0
    %857 = vmatprep.subr.bf16.mxu0 0
    %858 = vmatpush2.bf16.msra.mxu0 0
    %859 = vmatprep.subr.bf16.mxu0 0
    %860 = vmatpush2.bf16.msra.mxu0 0
    %861 = vmatprep.subr.bf16.mxu0 0
    %862 = vmatpush2.bf16.msra.mxu0 0
    %863 = vmatprep.subr.bf16.mxu0 0
    %864 = vmatpush2.bf16.msra.mxu0 0
    %865 = vmatprep.mubr.bf16.mxu0 0
    %866 = vmatmul.mubr.bf16.gmra.mxu0 %v791
    %v867 = vpop.f32.mrf.mxu0
    %v868 = vadd.f32 0.0, %v867
    %v869 = vpop.f32.mrf.mxu0
    %v870 = vpop.f32.mrf.mxu0
    %v871 = vpop.f32.mrf.mxu0
    %872 = vdwg.mxu0
    %v873 = vadd.f32 %v356, %v827
    %v874 = vxor.u32 %v873, 2147483648
    %v875 = vmul.f32 %v874, 1.442695
    %v876 = vpow.pop %v875
    %v877 = vadd.f32 %v876, 1.0
    %v878 = vrcp.pop %v877
    %v879 = vmul.f32 1.0, %v878
    %v880 = vadd.f32 %v358, %v829
    %v881 = vxor.u32 %v880, 2147483648
    %v882 = vmul.f32 %v881, 1.442695
    %v883 = vpow.pop %v882
    %v884 = vadd.f32 %v883, 1.0
    %v885 = vrcp.pop %v884
    %v886 = vmul.f32 1.0, %v885
    %v887 = vadd.f32 %v868, %v677
    %v888 = vmul.f32 %v879, %v887
    %v889 = vadd.f32 %v427, %v888
    %v890 = vtanh.pop %v889
    %v891 = vsub.f32 1.0, %v886
    %v892 = vmul.f32 %v891, %v890
    %v893 = vmul.f32 %v886, %v790
    %v894 = vadd.f32 %v892, %v893
    %v895 = vpack.c.bf16 %v894, %v894
    %896 = vmatprep.subr.bf16.mxu0 %v552
    %897 = vmatpush1.bf16.msra.mxu0 %v551
    %898 = vmatprep.subr.bf16.mxu0 %v549
    %899 = vmatpush1.bf16.msra.mxu0 %v548
    %900 = vmatprep.subr.bf16.mxu0 %v546
    %901 = vmatpush1.bf16.msra.mxu0 %v545
    %902 = vmatprep.subr.bf16.mxu0 %v543
    %903 = vmatpush1.bf16.msra.mxu0 %v542
    %904 = vmatprep.subr.bf16.mxu0 %v540
    %905 = vmatpush1.bf16.msra.mxu0 %v539
    %906 = vmatprep.subr.bf16.mxu0 %v537
    %907 = vmatpush1.bf16.msra.mxu0 %v536
    %908 = vmatprep.subr.bf16.mxu0 %v534
    %909 = vmatpush1.bf16.msra.mxu0 %v533
    %910 = vmatprep.subr.bf16.mxu0 %v531
    %911 = vmatpush1.bf16.msra.mxu0 %v530
    %912 = vmatprep.subr.bf16.mxu0 0
    %913 = vmatpush2.bf16.msra.mxu0 0
    %914 = vmatprep.subr.bf16.mxu0 0
    %915 = vmatpush2.bf16.msra.mxu0 0
    %916 = vmatprep.subr.bf16.mxu0 0
    %917 = vmatpush2.bf16.msra.mxu0 0
    %918 = vmatprep.subr.bf16.mxu0 0
    %919 = vmatpush2.bf16.msra.mxu0 0
    %920 = vmatprep.subr.bf16.mxu0 0
    %921 = vmatpush2.bf16.msra.mxu0 0
    %922 = vmatprep.subr.bf16.mxu0 0
    %923 = vmatpush2.bf16.msra.mxu0 0
    %924 = vmatprep.subr.bf16.mxu0 0
    %925 = vmatpush2.bf16.msra.mxu0 0
    %926 = vmatprep.subr.bf16.mxu0 0
    %927 = vmatpush2.bf16.msra.mxu0 0
    %928 = vmatprep.mubr.bf16.mxu0 0
    %929 = vmatmul.mubr.bf16.gmra.mxu0 %v895
    %v930 = vpop.f32.mrf.mxu0
    %v931 = vadd.f32 0.0, %v930
    %v932 = vpop.f32.mrf.mxu0
    %v933 = vadd.f32 0.0, %v932
    %v934 = vpop.f32.mrf.mxu0
    %v935 = vpop.f32.mrf.mxu0
    %936 = vdwg.mxu0
    %937 = vmatprep.subr.bf16.mxu0 0
    %938 = vmatpush1.bf16.msra.mxu0 %v553
    %939 = vmatprep.subr.bf16.mxu0 0
    %940 = vmatpush1.bf16.msra.mxu0 %v550
    %941 = vmatprep.subr.bf16.mxu0 0
    %942 = vmatpush1.bf16.msra.mxu0 %v547
    %943 = vmatprep.subr.bf16.mxu0 0
    %944 = vmatpush1.bf16.msra.mxu0 %v544
    %945 = vmatprep.subr.bf16.mxu0 0
    %946 = vmatpush1.bf16.msra.mxu0 %v541
    %947 = vmatprep.subr.bf16.mxu0 0
    %948 = vmatpush1.bf16.msra.mxu0 %v538
    %949 = vmatprep.subr.bf16.mxu0 0
    %950 = vmatpush1.bf16.msra.mxu0 %v535
    %951 = vmatprep.subr.bf16.mxu0 0
    %952 = vmatpush1.bf16.msra.mxu0 %v532
    %953 = vmatprep.subr.bf16.mxu0 0
    %954 = vmatpush2.bf16.msra.mxu0 0
    %955 = vmatprep.subr.bf16.mxu0 0
    %956 = vmatpush2.bf16.msra.mxu0 0
    %957 = vmatprep.subr.bf16.mxu0 0
    %958 = vmatpush2.bf16.msra.mxu0 0
    %959 = vmatprep.subr.bf16.mxu0 0
    %960 = vmatpush2.bf16.msra.mxu0 0
    %961 = vmatprep.subr.bf16.mxu0 0
    %962 = vmatpush2.bf16.msra.mxu0 0
    %963 = vmatprep.subr.bf16.mxu0 0
    %964 = vmatpush2.bf16.msra.mxu0 0
    %965 = vmatprep.subr.bf16.mxu0 0
    %966 = vmatpush2.bf16.msra.mxu0 0
    %967 = vmatprep.subr.bf16.mxu0 0
    %968 = vmatpush2.bf16.msra.mxu0 0
    %969 = vmatprep.mubr.bf16.mxu0 0
    %970 = vmatmul.mubr.bf16.gmra.mxu0 %v895
    %v971 = vpop.f32.mrf.mxu0
    %v972 = vadd.f32 0.0, %v971
    %v973 = vpop.f32.mrf.mxu0
    %v974 = vpop.f32.mrf.mxu0
    %v975 = vpop.f32.mrf.mxu0
    %976 = vdwg.mxu0
    %v977 = vadd.f32 %v360, %v931
    %v978 = vxor.u32 %v977, 2147483648
    %v979 = vmul.f32 %v978, 1.442695
    %v980 = vpow.pop %v979
    %v981 = vadd.f32 %v980, 1.0
    %v982 = vrcp.pop %v981
    %v983 = vmul.f32 1.0, %v982
    %v984 = vadd.f32 %v362, %v933
    %v985 = vxor.u32 %v984, 2147483648
    %v986 = vmul.f32 %v985, 1.442695
    %v987 = vpow.pop %v986
    %v988 = vadd.f32 %v987, 1.0
    %v989 = vrcp.pop %v988
    %v990 = vmul.f32 1.0, %v989
    %v991 = vadd.f32 %v972, %v677
    %v992 = vmul.f32 %v983, %v991
    %v993 = vadd.f32 %v430, %v992
    %v994 = vtanh.pop %v993
    %v995 = vsub.f32 1.0, %v990
    %v996 = vmul.f32 %v995, %v994
    %v997 = vmul.f32 %v990, %v894
    %v998 = vadd.f32 %v996, %v997
    %v999 = vpack.c.bf16 %v998, %v998
    %1000 = vmatprep.subr.bf16.mxu0 %v552
    %1001 = vmatpush1.bf16.msra.mxu0 %v551
    %1002 = vmatprep.subr.bf16.mxu0 %v549
    %1003 = vmatpush1.bf16.msra.mxu0 %v548
    %1004 = vmatprep.subr.bf16.mxu0 %v546
    %1005 = vmatpush1.bf16.msra.mxu0 %v545
    %1006 = vmatprep.subr.bf16.mxu0 %v543
    %1007 = vmatpush1.bf16.msra.mxu0 %v542
    %1008 = vmatprep.subr.bf16.mxu0 %v540
    %1009 = vmatpush1.bf16.msra.mxu0 %v539
    %1010 = vmatprep.subr.bf16.mxu0 %v537
    %1011 = vmatpush1.bf16.msra.mxu0 %v536
    %1012 = vmatprep.subr.bf16.mxu0 %v534
    %1013 = vmatpush1.bf16.msra.mxu0 %v533
    %1014 = vmatprep.subr.bf16.mxu0 %v531
    %1015 = vmatpush1.bf16.msra.mxu0 %v530
    %1016 = vmatprep.subr.bf16.mxu0 0
    %1017 = vmatpush2.bf16.msra.mxu0 0
    %1018 = vmatprep.subr.bf16.mxu0 0
    %1019 = vmatpush2.bf16.msra.mxu0 0
    %1020 = vmatprep.subr.bf16.mxu0 0
    %1021 = vmatpush2.bf16.msra.mxu0 0
    %1022 = vmatprep.subr.bf16.mxu0 0
    %1023 = vmatpush2.bf16.msra.mxu0 0
    %1024 = vmatprep.subr.bf16.mxu0 0
    %1025 = vmatpush2.bf16.msra.mxu0 0
    %1026 = vmatprep.subr.bf16.mxu0 0
    %1027 = vmatpush2.bf16.msra.mxu0 0
    %1028 = vmatprep.subr.bf16.mxu0 0
    %1029 = vmatpush2.bf16.msra.mxu0 0
    %1030 = vmatprep.subr.bf16.mxu0 0
    %1031 = vmatpush2.bf16.msra.mxu0 0
    %1032 = vmatprep.mubr.bf16.mxu0 0
    %1033 = vmatmul.mubr.bf16.gmra.mxu0 %v999
    %v1034 = vpop.f32.mrf.mxu0
    %v1035 = vadd.f32 0.0, %v1034
    %v1036 = vpop.f32.mrf.mxu0
    %v1037 = vadd.f32 0.0, %v1036
    %v1038 = vpop.f32.mrf.mxu0
    %v1039 = vpop.f32.mrf.mxu0
    %1040 = vdwg.mxu0
    %1041 = vmatprep.subr.bf16.mxu0 0
    %1042 = vmatpush1.bf16.msra.mxu0 %v553
    %1043 = vmatprep.subr.bf16.mxu0 0
    %1044 = vmatpush1.bf16.msra.mxu0 %v550
    %1045 = vmatprep.subr.bf16.mxu0 0
    %1046 = vmatpush1.bf16.msra.mxu0 %v547
    %1047 = vmatprep.subr.bf16.mxu0 0
    %1048 = vmatpush1.bf16.msra.mxu0 %v544
    %1049 = vmatprep.subr.bf16.mxu0 0
    %1050 = vmatpush1.bf16.msra.mxu0 %v541
    %1051 = vmatprep.subr.bf16.mxu0 0
    %1052 = vmatpush1.bf16.msra.mxu0 %v538
    %1053 = vmatprep.subr.bf16.mxu0 0
    %1054 = vmatpush1.bf16.msra.mxu0 %v535
    %1055 = vmatprep.subr.bf16.mxu0 0
    %1056 = vmatpush1.bf16.msra.mxu0 %v532
    %1057 = vmatprep.subr.bf16.mxu0 0
    %1058 = vmatpush2.bf16.msra.mxu0 0
    %1059 = vmatprep.subr.bf16.mxu0 0
    %1060 = vmatpush2.bf16.msra.mxu0 0
    %1061 = vmatprep.subr.bf16.mxu0 0
    %1062 = vmatpush2.bf16.msra.mxu0 0
    %1063 = vmatprep.subr.bf16.mxu0 0
    %1064 = vmatpush2.bf16.msra.mxu0 0
    %1065 = vmatprep.subr.bf16.mxu0 0
    %1066 = vmatpush2.bf16.msra.mxu0 0
    %1067 = vmatprep.subr.bf16.mxu0 0
    %1068 = vmatpush2.bf16.msra.mxu0 0
    %1069 = vmatprep.subr.bf16.mxu0 0
    %1070 = vmatpush2.bf16.msra.mxu0 0
    %1071 = vmatprep.subr.bf16.mxu0 0
    %1072 = vmatpush2.bf16.msra.mxu0 0
    %1073 = vmatprep.mubr.bf16.mxu0 0
    %1074 = vmatmul.mubr.bf16.gmra.mxu0 %v999
    %v1075 = vpop.f32.mrf.mxu0
    %v1076 = vadd.f32 0.0, %v1075
    %v1077 = vpop.f32.mrf.mxu0
    %v1078 = vpop.f32.mrf.mxu0
    %v1079 = vpop.f32.mrf.mxu0
    %1080 = vdwg.mxu0
    %v1081 = vadd.f32 %v366, %v1035
    %v1082 = vxor.u32 %v1081, 2147483648
    %v1083 = vmul.f32 %v1082, 1.442695
    %v1084 = vpow.pop %v1083
    %v1085 = vadd.f32 %v1084, 1.0
    %v1086 = vrcp.pop %v1085
    %v1087 = vmul.f32 1.0, %v1086
    %v1088 = vadd.f32 %v368, %v1037
    %v1089 = vxor.u32 %v1088, 2147483648
    %v1090 = vmul.f32 %v1089, 1.442695
    %v1091 = vpow.pop %v1090
    %v1092 = vadd.f32 %v1091, 1.0
    %v1093 = vrcp.pop %v1092
    %v1094 = vmul.f32 1.0, %v1093
    %v1095 = vadd.f32 %v1076, %v677
    %v1096 = vmul.f32 %v1087, %v1095
    %v1097 = vadd.f32 %v435, %v1096
    %v1098 = vtanh.pop %v1097
    %v1099 = vsub.f32 1.0, %v1094
    %v1100 = vmul.f32 %v1099, %v1098
    %v1101 = vmul.f32 %v1094, %v998
    %v1102 = vadd.f32 %v1100, %v1101
    %v1103 = vpack.c.bf16 %v1102, %v1102
    %1104 = vmatprep.subr.bf16.mxu0 %v552
    %1105 = vmatpush1.bf16.msra.mxu0 %v551
    %1106 = vmatprep.subr.bf16.mxu0 %v549
    %1107 = vmatpush1.bf16.msra.mxu0 %v548
    %1108 = vmatprep.subr.bf16.mxu0 %v546
    %1109 = vmatpush1.bf16.msra.mxu0 %v545
    %1110 = vmatprep.subr.bf16.mxu0 %v543
    %1111 = vmatpush1.bf16.msra.mxu0 %v542
    %1112 = vmatprep.subr.bf16.mxu0 %v540
    %1113 = vmatpush1.bf16.msra.mxu0 %v539
    %1114 = vmatprep.subr.bf16.mxu0 %v537
    %1115 = vmatpush1.bf16.msra.mxu0 %v536
    %1116 = vmatprep.subr.bf16.mxu0 %v534
    %1117 = vmatpush1.bf16.msra.mxu0 %v533
    %1118 = vmatprep.subr.bf16.mxu0 %v531
    %1119 = vmatpush1.bf16.msra.mxu0 %v530
    %1120 = vmatprep.subr.bf16.mxu0 0
    %1121 = vmatpush2.bf16.msra.mxu0 0
    %1122 = vmatprep.subr.bf16.mxu0 0
    %1123 = vmatpush2.bf16.msra.mxu0 0
    %1124 = vmatprep.subr.bf16.mxu0 0
    %1125 = vmatpush2.bf16.msra.mxu0 0
    %1126 = vmatprep.subr.bf16.mxu0 0
    %1127 = vmatpush2.bf16.msra.mxu0 0
    %1128 = vmatprep.subr.bf16.mxu0 0
    %1129 = vmatpush2.bf16.msra.mxu0 0
    %1130 = vmatprep.subr.bf16.mxu0 0
    %1131 = vmatpush2.bf16.msra.mxu0 0
    %1132 = vmatprep.subr.bf16.mxu0 0
    %1133 = vmatpush2.bf16.msra.mxu0 0
    %1134 = vmatprep.subr.bf16.mxu0 0
    %1135 = vmatpush2.bf16.msra.mxu0 0
    %1136 = vmatprep.mubr.bf16.mxu0 0
    %1137 = vmatmul.mubr.bf16.gmra.mxu0 %v1103
    %v1138 = vpop.f32.mrf.mxu0
    %v1139 = vadd.f32 0.0, %v1138
    %v1140 = vpop.f32.mrf.mxu0
    %v1141 = vadd.f32 0.0, %v1140
    %v1142 = vpop.f32.mrf.mxu0
    %v1143 = vpop.f32.mrf.mxu0
    %1144 = vdwg.mxu0
    %1145 = vmatprep.subr.bf16.mxu0 0
    %1146 = vmatpush1.bf16.msra.mxu0 %v553
    %1147 = vmatprep.subr.bf16.mxu0 0
    %1148 = vmatpush1.bf16.msra.mxu0 %v550
    %1149 = vmatprep.subr.bf16.mxu0 0
    %1150 = vmatpush1.bf16.msra.mxu0 %v547
    %1151 = vmatprep.subr.bf16.mxu0 0
    %1152 = vmatpush1.bf16.msra.mxu0 %v544
    %1153 = vmatprep.subr.bf16.mxu0 0
    %1154 = vmatpush1.bf16.msra.mxu0 %v541
    %1155 = vmatprep.subr.bf16.mxu0 0
    %1156 = vmatpush1.bf16.msra.mxu0 %v538
    %1157 = vmatprep.subr.bf16.mxu0 0
    %1158 = vmatpush1.bf16.msra.mxu0 %v535
    %1159 = vmatprep.subr.bf16.mxu0 0
    %1160 = vmatpush1.bf16.msra.mxu0 %v532
    %1161 = vmatprep.subr.bf16.mxu0 0
    %1162 = vmatpush2.bf16.msra.mxu0 0
    %1163 = vmatprep.subr.bf16.mxu0 0
    %1164 = vmatpush2.bf16.msra.mxu0 0
    %1165 = vmatprep.subr.bf16.mxu0 0
    %1166 = vmatpush2.bf16.msra.mxu0 0
    %1167 = vmatprep.subr.bf16.mxu0 0
    %1168 = vmatpush2.bf16.msra.mxu0 0
    %1169 = vmatprep.subr.bf16.mxu0 0
    %1170 = vmatpush2.bf16.msra.mxu0 0
    %1171 = vmatprep.subr.bf16.mxu0 0
    %1172 = vmatpush2.bf16.msra.mxu0 0
    %1173 = vmatprep.subr.bf16.mxu0 0
    %1174 = vmatpush2.bf16.msra.mxu0 0
    %1175 = vmatprep.subr.bf16.mxu0 0
    %1176 = vmatpush2.bf16.msra.mxu0 0
    %1177 = vmatprep.mubr.bf16.mxu0 0
    %1178 = vmatmul.mubr.bf16.gmra.mxu0 %v1103
    %v1179 = vpop.f32.mrf.mxu0
    %v1180 = vadd.f32 0.0, %v1179
    %v1181 = vpop.f32.mrf.mxu0
    %v1182 = vpop.f32.mrf.mxu0
    %v1183 = vpop.f32.mrf.mxu0
    %1184 = vdwg.mxu0
    %v1185 = vadd.f32 %v370, %v1139
    %v1186 = vxor.u32 %v1185, 2147483648
    %v1187 = vmul.f32 %v1186, 1.442695
    %v1188 = vpow.pop %v1187
    %v1189 = vadd.f32 %v1188, 1.0
    %v1190 = vrcp.pop %v1189
    %v1191 = vmul.f32 1.0, %v1190
    %v1192 = vadd.f32 %v372, %v1141
    %v1193 = vxor.u32 %v1192, 2147483648
    %v1194 = vmul.f32 %v1193, 1.442695
    %v1195 = vpow.pop %v1194
    %v1196 = vadd.f32 %v1195, 1.0
    %v1197 = vrcp.pop %v1196
    %v1198 = vmul.f32 1.0, %v1197
    %v1199 = vadd.f32 %v1180, %v677
    %v1200 = vmul.f32 %v1191, %v1199
    %v1201 = vadd.f32 %v438, %v1200
    %v1202 = vtanh.pop %v1201
    %v1203 = vsub.f32 1.0, %v1198
    %v1204 = vmul.f32 %v1203, %v1202
    %v1205 = vmul.f32 %v1198, %v1102
    %v1206 = vadd.f32 %v1204, %v1205
    %v1207 = vpack.c.bf16 %v1206, %v1206
    %1208 = vmatprep.subr.bf16.mxu0 %v552
    %1209 = vmatpush1.bf16.msra.mxu0 %v551
    %1210 = vmatprep.subr.bf16.mxu0 %v549
    %1211 = vmatpush1.bf16.msra.mxu0 %v548
    %1212 = vmatprep.subr.bf16.mxu0 %v546
    %1213 = vmatpush1.bf16.msra.mxu0 %v545
    %1214 = vmatprep.subr.bf16.mxu0 %v543
    %1215 = vmatpush1.bf16.msra.mxu0 %v542
    %1216 = vmatprep.subr.bf16.mxu0 %v540
    %1217 = vmatpush1.bf16.msra.mxu0 %v539
    %1218 = vmatprep.subr.bf16.mxu0 %v537
    %1219 = vmatpush1.bf16.msra.mxu0 %v536
    %1220 = vmatprep.subr.bf16.mxu0 %v534
    %1221 = vmatpush1.bf16.msra.mxu0 %v533
    %1222 = vmatprep.subr.bf16.mxu0 %v531
    %1223 = vmatpush1.bf16.msra.mxu0 %v530
    %1224 = vmatprep.subr.bf16.mxu0 0
    %1225 = vmatpush2.bf16.msra.mxu0 0
    %1226 = vmatprep.subr.bf16.mxu0 0
    %1227 = vmatpush2.bf16.msra.mxu0 0
    %1228 = vmatprep.subr.bf16.mxu0 0
    %1229 = vmatpush2.bf16.msra.mxu0 0
    %1230 = vmatprep.subr.bf16.mxu0 0
    %1231 = vmatpush2.bf16.msra.mxu0 0
    %1232 = vmatprep.subr.bf16.mxu0 0
    %1233 = vmatpush2.bf16.msra.mxu0 0
    %1234 = vmatprep.subr.bf16.mxu0 0
    %1235 = vmatpush2.bf16.msra.mxu0 0
    %1236 = vmatprep.subr.bf16.mxu0 0
    %1237 = vmatpush2.bf16.msra.mxu0 0
    %1238 = vmatprep.subr.bf16.mxu0 0
    %1239 = vmatpush2.bf16.msra.mxu0 0
    %1240 = vmatprep.mubr.bf16.mxu0 0
    %1241 = vmatmul.mubr.bf16.gmra.mxu0 %v1207
    %v1242 = vpop.f32.mrf.mxu0
    %v1243 = vadd.f32 0.0, %v1242
    %v1244 = vpop.f32.mrf.mxu0
    %v1245 = vadd.f32 0.0, %v1244
    %v1246 = vpop.f32.mrf.mxu0
    %v1247 = vpop.f32.mrf.mxu0
    %1248 = vdwg.mxu0
    %1249 = vmatprep.subr.bf16.mxu0 0
    %1250 = vmatpush1.bf16.msra.mxu0 %v553
    %1251 = vmatprep.subr.bf16.mxu0 0
    %1252 = vmatpush1.bf16.msra.mxu0 %v550
    %1253 = vmatprep.subr.bf16.mxu0 0
    %1254 = vmatpush1.bf16.msra.mxu0 %v547
    %1255 = vmatprep.subr.bf16.mxu0 0
    %1256 = vmatpush1.bf16.msra.mxu0 %v544
    %1257 = vmatprep.subr.bf16.mxu0 0
    %1258 = vmatpush1.bf16.msra.mxu0 %v541
    %1259 = vmatprep.subr.bf16.mxu0 0
    %1260 = vmatpush1.bf16.msra.mxu0 %v538
    %1261 = vmatprep.subr.bf16.mxu0 0
    %1262 = vmatpush1.bf16.msra.mxu0 %v535
    %1263 = vmatprep.subr.bf16.mxu0 0
    %1264 = vmatpush1.bf16.msra.mxu0 %v532
    %1265 = vmatprep.subr.bf16.mxu0 0
    %1266 = vmatpush2.bf16.msra.mxu0 0
    %1267 = vmatprep.subr.bf16.mxu0 0
    %1268 = vmatpush2.bf16.msra.mxu0 0
    %1269 = vmatprep.subr.bf16.mxu0 0
    %1270 = vmatpush2.bf16.msra.mxu0 0
    %1271 = vmatprep.subr.bf16.mxu0 0
    %1272 = vmatpush2.bf16.msra.mxu0 0
    %1273 = vmatprep.subr.bf16.mxu0 0
    %1274 = vmatpush2.bf16.msra.mxu0 0
    %1275 = vmatprep.subr.bf16.mxu0 0
    %1276 = vmatpush2.bf16.msra.mxu0 0
    %1277 = vmatprep.subr.bf16.mxu0 0
    %1278 = vmatpush2.bf16.msra.mxu0 0
    %1279 = vmatprep.subr.bf16.mxu0 0
    %1280 = vmatpush2.bf16.msra.mxu0 0
    %1281 = vmatprep.mubr.bf16.mxu0 0
    %1282 = vmatmul.mubr.bf16.gmra.mxu0 %v1207
    %v1283 = vpop.f32.mrf.mxu0
    %v1284 = vadd.f32 0.0, %v1283
    %v1285 = vpop.f32.mrf.mxu0
    %v1286 = vpop.f32.mrf.mxu0
    %v1287 = vpop.f32.mrf.mxu0
    %1288 = vdwg.mxu0
    %v1289 = vadd.f32 %v376, %v1243
    %v1290 = vxor.u32 %v1289, 2147483648
    %v1291 = vmul.f32 %v1290, 1.442695
    %v1292 = vpow.pop %v1291
    %v1293 = vadd.f32 %v1292, 1.0
    %v1294 = vrcp.pop %v1293
    %v1295 = vmul.f32 1.0, %v1294
    %v1296 = vadd.f32 %v378, %v1245
    %v1297 = vxor.u32 %v1296, 2147483648
    %v1298 = vmul.f32 %v1297, 1.442695
    %v1299 = vpow.pop %v1298
    %v1300 = vadd.f32 %v1299, 1.0
    %v1301 = vrcp.pop %v1300
    %v1302 = vmul.f32 1.0, %v1301
    %v1303 = vadd.f32 %v1284, %v677
    %v1304 = vmul.f32 %v1295, %v1303
    %v1305 = vadd.f32 %v443, %v1304
    %v1306 = vtanh.pop %v1305
    %v1307 = vsub.f32 1.0, %v1302
    %v1308 = vmul.f32 %v1307, %v1306
    %v1309 = vmul.f32 %v1302, %v1206
    %v1310 = vadd.f32 %v1308, %v1309
    %v1311 = vpack.c.bf16 %v1310, %v1310
    %1312 = vmatprep.subr.bf16.mxu0 %v552
    %1313 = vmatpush1.bf16.msra.mxu0 %v551
    %1314 = vmatprep.subr.bf16.mxu0 %v549
    %1315 = vmatpush1.bf16.msra.mxu0 %v548
    %1316 = vmatprep.subr.bf16.mxu0 %v546
    %1317 = vmatpush1.bf16.msra.mxu0 %v545
    %1318 = vmatprep.subr.bf16.mxu0 %v543
    %1319 = vmatpush1.bf16.msra.mxu0 %v542
    %1320 = vmatprep.subr.bf16.mxu0 %v540
    %1321 = vmatpush1.bf16.msra.mxu0 %v539
    %1322 = vmatprep.subr.bf16.mxu0 %v537
    %1323 = vmatpush1.bf16.msra.mxu0 %v536
    %1324 = vmatprep.subr.bf16.mxu0 %v534
    %1325 = vmatpush1.bf16.msra.mxu0 %v533
    %1326 = vmatprep.subr.bf16.mxu0 %v531
    %1327 = vmatpush1.bf16.msra.mxu0 %v530
    %1328 = vmatprep.subr.bf16.mxu0 0
    %1329 = vmatpush2.bf16.msra.mxu0 0
    %1330 = vmatprep.subr.bf16.mxu0 0
    %1331 = vmatpush2.bf16.msra.mxu0 0
    %1332 = vmatprep.subr.bf16.mxu0 0
    %1333 = vmatpush2.bf16.msra.mxu0 0
    %1334 = vmatprep.subr.bf16.mxu0 0
    %1335 = vmatpush2.bf16.msra.mxu0 0
    %1336 = vmatprep.subr.bf16.mxu0 0
    %1337 = vmatpush2.bf16.msra.mxu0 0
    %1338 = vmatprep.subr.bf16.mxu0 0
    %1339 = vmatpush2.bf16.msra.mxu0 0
    %1340 = vmatprep.subr.bf16.mxu0 0
    %1341 = vmatpush2.bf16.msra.mxu0 0
    %1342 = vmatprep.subr.bf16.mxu0 0
    %1343 = vmatpush2.bf16.msra.mxu0 0
    %1344 = vmatprep.mubr.bf16.mxu0 0
    %1345 = vmatmul.mubr.bf16.gmra.mxu0 %v1311
    %v1346 = vpop.f32.mrf.mxu0
    %v1347 = vadd.f32 0.0, %v1346
    %v1348 = vpop.f32.mrf.mxu0
    %v1349 = vadd.f32 0.0, %v1348
    %v1350 = vpop.f32.mrf.mxu0
    %v1351 = vpop.f32.mrf.mxu0
    %1352 = vdwg.mxu0
    %1353 = vmatprep.subr.bf16.mxu0 0
    %1354 = vmatpush1.bf16.msra.mxu0 %v553
    %1355 = vmatprep.subr.bf16.mxu0 0
    %1356 = vmatpush1.bf16.msra.mxu0 %v550
    %1357 = vmatprep.subr.bf16.mxu0 0
    %1358 = vmatpush1.bf16.msra.mxu0 %v547
    %1359 = vmatprep.subr.bf16.mxu0 0
    %1360 = vmatpush1.bf16.msra.mxu0 %v544
    %1361 = vmatprep.subr.bf16.mxu0 0
    %1362 = vmatpush1.bf16.msra.mxu0 %v541
    %1363 = vmatprep.subr.bf16.mxu0 0
    %1364 = vmatpush1.bf16.msra.mxu0 %v538
    %1365 = vmatprep.subr.bf16.mxu0 0
    %1366 = vmatpush1.bf16.msra.mxu0 %v535
    %1367 = vmatprep.subr.bf16.mxu0 0
    %1368 = vmatpush1.bf16.msra.mxu0 %v532
    %1369 = vmatprep.subr.bf16.mxu0 0
    %1370 = vmatpush2.bf16.msra.mxu0 0
    %1371 = vmatprep.subr.bf16.mxu0 0
    %1372 = vmatpush2.bf16.msra.mxu0 0
    %1373 = vmatprep.subr.bf16.mxu0 0
    %1374 = vmatpush2.bf16.msra.mxu0 0
    %1375 = vmatprep.subr.bf16.mxu0 0
    %1376 = vmatpush2.bf16.msra.mxu0 0
    %1377 = vmatprep.subr.bf16.mxu0 0
    %1378 = vmatpush2.bf16.msra.mxu0 0
    %1379 = vmatprep.subr.bf16.mxu0 0
    %1380 = vmatpush2.bf16.msra.mxu0 0
    %1381 = vmatprep.subr.bf16.mxu0 0
    %1382 = vmatpush2.bf16.msra.mxu0 0
    %1383 = vmatprep.subr.bf16.mxu0 0
    %1384 = vmatpush2.bf16.msra.mxu0 0
    %1385 = vmatprep.mubr.bf16.mxu0 0
    %1386 = vmatmul.mubr.bf16.gmra.mxu0 %v1311
    %v1387 = vpop.f32.mrf.mxu0
    %v1388 = vadd.f32 0.0, %v1387
    %v1389 = vpop.f32.mrf.mxu0
    %v1390 = vpop.f32.mrf.mxu0
    %v1391 = vpop.f32.mrf.mxu0
    %1392 = vdwg.mxu0
    %v1393 = vadd.f32 %v380, %v1347
    %v1394 = vxor.u32 %v1393, 2147483648
    %v1395 = vmul.f32 %v1394, 1.442695
    %v1396 = vpow.pop %v1395
    %v1397 = vadd.f32 %v1396, 1.0
    %v1398 = vrcp.pop %v1397
    %v1399 = vmul.f32 1.0, %v1398
    %v1400 = vadd.f32 %v382, %v1349
    %v1401 = vxor.u32 %v1400, 2147483648
    %v1402 = vmul.f32 %v1401, 1.442695
    %v1403 = vpow.pop %v1402
    %v1404 = vadd.f32 %v1403, 1.0
    %v1405 = vrcp.pop %v1404
    %v1406 = vmul.f32 1.0, %v1405
    %v1407 = vadd.f32 %v1388, %v677
    %v1408 = vmul.f32 %v1399, %v1407
    %v1409 = vadd.f32 %v446, %v1408
    %v1410 = vtanh.pop %v1409
    %v1411 = vsub.f32 1.0, %v1406
    %v1412 = vmul.f32 %v1411, %v1410
    %v1413 = vmul.f32 %v1406, %v1310
    %v1414 = vadd.f32 %v1412, %v1413
    %1415 = vst [vmem:[#allocation2] sm:$0xff] %v1414
    // Predicated region
    $region38: #{tpu_custom_call.1} parent=1 // pred_check
      %p1416 = pneg %p63
    $region39: #{tpu_custom_call.1} parent=1 // pred_check_branch
      %1418 = sbr.rel (%p1416) target = $region41
    $region40: #{tpu_custom_call.1} parent=1 // pred_region
      %1419 = vst [vmem:[#allocation9] sm:$0xff] %v1414
    $region41: #{tpu_custom_call.1} parent=1 // pred_fallthru
      _
    // Predicated region
    $region42: #{tpu_custom_call.1} parent=1 // pred_check
      _
    $region43: #{tpu_custom_call.1} parent=1 // pred_check_branch
      %1421 = sbr.rel (0) target = $region45
    $region44: #{tpu_custom_call.1} parent=1 // pred_region
      %s1423 = ssub.s32 128, 128
      %1424 = vsyncadd [#allocation5], %s1423
      %s1426 = sshll.u32 [#allocation9], 4
      %s1427 = int_to_ptr.vmem [resolvable:$true] %s1426
      %1429 = dma.vmem_to_hbm [thread:$0]  %s1427, 128, %s5, [#allocation5]
    $region45: #{tpu_custom_call.1} parent=1 // pred_fallthru
      _
    // Predicated region
    $region46: #{tpu_custom_call.1} parent=1 // pred_check
      _
    $region47: #{tpu_custom_call.1} parent=1 // pred_check_branch
      %1431 = sbr.rel (0) target = $region49
    $region48: #{tpu_custom_call.1} parent=1 // pred_region
      %1432 = dma.done [#allocation5], 128
    $region49: #{tpu_custom_call.1} parent=1 // pred_fallthru
      _
    %1433 = vsyncpa [#allocation4], 1
    %1434 = vsyncpa [#allocation7], 1
    %1435 = vsyncpa [#allocation5], 1

</llo_original>
